<compile_context>
chip_gen: v7x
topology: tpu7x:2x2x1
jax: 0.10.0
libtpu: 0.0.40
codegen_flags: <defaults>
</compile_context>

<pallas_src>
import jax
import jax.numpy as jnp
from jax.experimental import pallas as pl
from jax.experimental.pallas import tpu as pltpu

# ----------------------------------------------------------------------------
# Model dimensions (hubert-base-ls960: hidden_size = 768; head: 768->512->D)
# ----------------------------------------------------------------------------
HUBERT_HIDDEN = 768     # self.hubert.config.hidden_size
MID_DIM       = 512     # projection1 out / LayerNorm dim
EMBED_DIM     = 512     # embedding_dim (projection2 out)
FRAME         = 320     # HuBERT downsampling factor (Na = T // 320)
LN_EPS        = 1e-5    # nn.LayerNorm default eps
PROC_EPS      = 1e-7    # Wav2Vec2 feature-extractor normalization eps


def _choose_tile_m(ntok):
    """Token-tile rows: big enough to amortize per-step overhead, >=2 tiles
    when possible (v7x megacore), never much larger than the problem."""
    for t in (1024, 512, 256):
        if ntok >= 2 * t:
            return t
    # Small problems: one snug tile, rounded up to the 8-row sublane quantum.
    return min(256, max(8, -(-ntok // 8) * 8))


# ----------------------------------------------------------------------------
# Pallas kernel: fused
#   normalize(raw frames) -> @ Wc (= w_feat @ w1) + b1 -> LayerNorm -> @ W2 + b2
# One grid step processes one TILE_M-row token tile.
# ----------------------------------------------------------------------------
def _audio_embed_kernel(f_ref, mu_ref, rstd_ref, wc_ref, b1_ref, g_ref,
                        beta_ref, w2_ref, b2_ref, o_ref):
    # Stage 0 (fused wrapper work): per-utterance normalization + bf16 cast.
    f = ((f_ref[...] - mu_ref[...]) * rstd_ref[...]).astype(jnp.bfloat16)

    # Stage 1: folded feature projection + projection1 (320 -> 512), one MXU
    # matmul with bf16 operands and f32 accumulation.
    x = jnp.dot(f, wc_ref[...], preferred_element_type=jnp.float32)
    x = x + b1_ref[...]                                            # (TM, 512)

    # Stage 2: LayerNorm over the last dim, single-pass stats in f32.
    mu  = jnp.mean(x, axis=-1, keepdims=True)
    msq = jnp.mean(x * x, axis=-1, keepdims=True)
    var = jnp.maximum(msq - mu * mu, 0.0)
    xn  = (x - mu) * jax.lax.rsqrt(var + LN_EPS)                   # rsqrt -> EUP
    xn  = xn * g_ref[...] + beta_ref[...]                          # (TM, 512)

    # Stage 3: projection2 (512 -> D).
    o = jnp.dot(xn.astype(jnp.bfloat16), w2_ref[...],
                preferred_element_type=jnp.float32)
    o = o + b2_ref[...]                                            # (TM, D)

    o_ref[...] = o.astype(o_ref.dtype)


def audio_embedder_head_pallas(frames, mean_tok, rstd_tok, w_combined, b1,
                               gamma, beta, w2, b2, *, out_dtype=jnp.float32):
    """frames: (Ntok, 320) raw f32 -> (Ntok, D) in `out_dtype`."""
    ntok = frames.shape[0]
    D = w2.shape[1]
    tile_m = _choose_tile_m(ntok)
    n_tiles = pl.cdiv(ntok, tile_m)

    frames_f32 = frames.astype(jnp.float32)
    mean_2d = mean_tok.reshape(ntok, 1).astype(jnp.float32)
    rstd_2d = rstd_tok.reshape(ntok, 1).astype(jnp.float32)
    wc_bf   = w_combined.astype(jnp.bfloat16)          # (320, 512)
    w2_bf   = w2.astype(jnp.bfloat16)                  # (512, D)
    b1_2d   = b1.reshape(1, MID_DIM).astype(jnp.float32)
    g_2d    = gamma.reshape(1, MID_DIM).astype(jnp.float32)
    beta_2d = beta.reshape(1, MID_DIM).astype(jnp.float32)
    b2_2d   = b2.reshape(1, D).astype(jnp.float32)

    rows = n_tiles * tile_m
    flops = 2 * rows * (FRAME * MID_DIM + MID_DIM * D)
    bytes_accessed = (frames_f32.size * 4
                      + (mean_2d.size + rstd_2d.size) * 4
                      + (wc_bf.size + w2_bf.size) * 2
                      + (b1_2d.size + g_2d.size + beta_2d.size + b2_2d.size) * 4
                      + ntok * D * jnp.dtype(out_dtype).itemsize)

    out = pl.pallas_call(
        _audio_embed_kernel,
        out_shape=jax.ShapeDtypeStruct((ntok, D), out_dtype),
        grid_spec=pltpu.PrefetchScalarGridSpec(
            num_scalar_prefetch=0,
            grid=(n_tiles,),
            in_specs=[
                pl.BlockSpec((tile_m, FRAME),   lambda m: (m, 0)),  # raw frames
                pl.BlockSpec((tile_m, 1),       lambda m: (m, 0)),  # per-token mean
                pl.BlockSpec((tile_m, 1),       lambda m: (m, 0)),  # per-token 1/std
                pl.BlockSpec((FRAME, MID_DIM),  lambda m: (0, 0)),  # folded Wc
                pl.BlockSpec((1, MID_DIM),      lambda m: (0, 0)),  # b1
                pl.BlockSpec((1, MID_DIM),      lambda m: (0, 0)),  # gamma
                pl.BlockSpec((1, MID_DIM),      lambda m: (0, 0)),  # beta
                pl.BlockSpec((MID_DIM, D),      lambda m: (0, 0)),  # w2
                pl.BlockSpec((1, D),            lambda m: (0, 0)),  # b2
            ],
            out_specs=pl.BlockSpec((tile_m, D), lambda m: (m, 0)),
        ),
        compiler_params=pltpu.CompilerParams(
            dimension_semantics=("parallel",),
            vmem_limit_bytes=32 * 1024 * 1024),
        cost_estimate=pl.CostEstimate(flops=flops,
                                      transcendentals=rows,
                                      bytes_accessed=bytes_accessed),
    )(frames_f32, mean_2d, rstd_2d, wc_bf, b1_2d, g_2d, beta_2d, w2_bf, b2_2d)
    return out


# ----------------------------------------------------------------------------
# Plain-JAX glue: framing + per-utterance statistics (normalization itself is
# applied INSIDE the kernel, so the frame matrix makes no extra HBM passes).
# ----------------------------------------------------------------------------
def preprocess_frames(audio):
    """(B, T) raw audio -> raw frames (B*Na, FRAME), per-token mean / inv_std."""
    B, T = audio.shape
    Na = T // FRAME
    mean = jnp.mean(audio, axis=-1, keepdims=True)                 # (B, 1)
    var = jnp.var(audio, axis=-1, keepdims=True)
    rstd = jax.lax.rsqrt(var + PROC_EPS)                           # (B, 1)
    frames = audio[:, : Na * FRAME].reshape(B * Na, FRAME)         # raw, f32
    mean_tok = jnp.broadcast_to(mean, (B, Na)).reshape(B * Na, 1)
    rstd_tok = jnp.broadcast_to(rstd, (B, Na)).reshape(B * Na, 1)
    return frames, mean_tok, rstd_tok, B, Na


def fold_weights(params):
    """Wc = w_feat @ w1 (f32).  Exact fold: both ops before the LayerNorm are
    linear.  In a real deployment this is precomputed once at load time."""
    return jnp.dot(params["w_feat"].astype(jnp.float32),
                   params["w1"].astype(jnp.float32),
                   preferred_element_type=jnp.float32)


def audio_embedder_forward(audio, params, *, out_dtype=jnp.float32):
    """Full AudioEmbedder.forward: (B, T) -> (B, T//320, EMBED_DIM)."""
    frames, mean_tok, rstd_tok, B, Na = preprocess_frames(audio)
    wc = fold_weights(params)
    out = audio_embedder_head_pallas(
        frames, mean_tok, rstd_tok, wc, params["b1"], params["gamma"],
        params["beta"], params["w2"], params["b2"], out_dtype=out_dtype)
    return out.reshape(B, Na, -1)


# ----------------------------------------------------------------------------
# References
# ----------------------------------------------------------------------------
def reference_forward_folded(audio, params):
    """Mirrors the kernel math (folded weight, bf16 operands, f32 accumulate)."""
    frames, mean_tok, rstd_tok, B, Na = preprocess_frames(audio)
    wc = fold_weights(params)
    f = ((frames - mean_tok) * rstd_tok).astype(jnp.bfloat16)
    x = jnp.dot(f, wc.astype(jnp.bfloat16),
                preferred_element_type=jnp.float32) + params["b1"]
    mu = jnp.mean(x, axis=-1, keepdims=True)
    var = jnp.mean((x - mu) ** 2, axis=-1, keepdims=True)
    xn = (x - mu) * jax.lax.rsqrt(var + LN_EPS)
    xn = xn * params["gamma"] + params["beta"]
    o = jnp.dot(xn.astype(jnp.bfloat16), params["w2"].astype(jnp.bfloat16),
                preferred_element_type=jnp.float32) + params["b2"]
    return o.reshape(B, Na, -1)


def reference_forward_f32(audio, params):
    """Original (un-folded) op order, full f32: validates the algebraic fold."""
    frames, mean_tok, rstd_tok, B, Na = preprocess_frames(audio)
    f = (frames - mean_tok) * rstd_tok
    h = jnp.dot(f, params["w_feat"])
    x = jnp.dot(h, params["w1"]) + params["b1"]
    mu = jnp.mean(x, axis=-1, keepdims=True)
    var = jnp.mean((x - mu) ** 2, axis=-1, keepdims=True)
    xn = (x - mu) * jax.lax.rsqrt(var + LN_EPS)
    xn = xn * params["gamma"] + params["beta"]
    o = jnp.dot(xn, params["w2"]) + params["b2"]
    return o.reshape(B, Na, -1)


if __name__ == "__main__":
    key = jax.random.PRNGKey(0)
    k_audio, k_feat, k_w1, k_b1, k_w2, k_b2 = jax.random.split(key, 6)

    # Small shapes: B=2, T=2560 -> Na = 8 audio tokens per utterance.
    B, T = 2, 2560
    Na = T // FRAME

    audio = jax.random.normal(k_audio, (B, T), dtype=jnp.float32)

    params = {
        # HuBERT stand-in projection (deterministic, not a checkpoint)
        "w_feat": 0.05 * jax.random.normal(k_feat, (FRAME, HUBERT_HIDDEN),
                                           dtype=jnp.float32),
        # projection1: Linear(768, 512)
        "w1": 0.02 * jax.random.normal(k_w1, (HUBERT_HIDDEN, MID_DIM),
                                       dtype=jnp.float32),
        "b1": 0.01 * jax.random.normal(k_b1, (MID_DIM,), dtype=jnp.float32),
        # LayerNorm(512)
        "gamma": jnp.ones((MID_DIM,), dtype=jnp.float32),
        "beta":  jnp.zeros((MID_DIM,), dtype=jnp.float32),
        # projection2: Linear(512, EMBED_DIM)
        "w2": 0.02 * jax.random.normal(k_w2, (MID_DIM, EMBED_DIM),
                                       dtype=jnp.float32),
        "b2": 0.01 * jax.random.normal(k_b2, (EMBED_DIM,), dtype=jnp.float32),
    }

    out = jax.block_until_ready(audio_embedder_forward(audio, params))
    assert out.shape == (B, Na, EMBED_DIM), out.shape
    assert not bool(jnp.any(jnp.isnan(out)))

    # 1) Tight check against a plain-JAX mirror of the kernel's math.
    ref = jax.block_until_ready(reference_forward_folded(audio, params))
    err1 = float(jnp.max(jnp.abs(out - ref)))
    assert jnp.allclose(out, ref, atol=2e-2, rtol=2e-2), err1

    # 2) Looser check against the original (un-folded) f32 op order, which
    #    validates that the weight fold + bf16 rounding stay within tolerance.
    ref32 = jax.block_until_ready(reference_forward_f32(audio, params))
    err2 = float(jnp.max(jnp.abs(out - ref32)))
    assert jnp.allclose(out, ref32, atol=5e-2, rtol=5e-2), err2

    print("KERNEL_OK")
</pallas_src>

<mosaic_0001>
module attributes {stable_mosaic.version = 11 : i64} {
  func.func @_audio_embed_kernel(%arg0: i32, %arg1: memref<16x320xf32, #tpu.memory_space<vmem>>, %arg2: memref<16x1xf32, #tpu.memory_space<vmem>>, %arg3: memref<16x1xf32, #tpu.memory_space<vmem>>, %arg4: memref<320x512xbf16, #tpu.memory_space<vmem>>, %arg5: memref<1x512xf32, #tpu.memory_space<vmem>>, %arg6: memref<1x512xf32, #tpu.memory_space<vmem>>, %arg7: memref<1x512xf32, #tpu.memory_space<vmem>>, %arg8: memref<512x512xbf16, #tpu.memory_space<vmem>>, %arg9: memref<1x512xf32, #tpu.memory_space<vmem>>, %arg10: memref<16x512xf32, #tpu.memory_space<vmem>>) attributes {dimension_semantics = [#tpu.dimension_semantics<parallel>], iteration_bounds = array<i64: 1>, scalar_prefetch = 0 : i64, scratch_operands = 0 : i64, tpu.core_type = #tpu.core_type<tc>, window_params = [{transform_indices = @transform_0, window_bounds = array<i64: 16, 320>}, {transform_indices = @transform_1, window_bounds = array<i64: 16, 1>}, {transform_indices = @transform_2, window_bounds = array<i64: 16, 1>}, {pipeline_mode = #tpu.pipeline_mode<synchronous>, transform_indices = @transform_3, window_bounds = array<i64: 320, 512>}, {pipeline_mode = #tpu.pipeline_mode<synchronous>, transform_indices = @transform_4, window_bounds = array<i64: 1, 512>}, {pipeline_mode = #tpu.pipeline_mode<synchronous>, transform_indices = @transform_5, window_bounds = array<i64: 1, 512>}, {pipeline_mode = #tpu.pipeline_mode<synchronous>, transform_indices = @transform_6, window_bounds = array<i64: 1, 512>}, {pipeline_mode = #tpu.pipeline_mode<synchronous>, transform_indices = @transform_7, window_bounds = array<i64: 512, 512>}, {pipeline_mode = #tpu.pipeline_mode<synchronous>, transform_indices = @transform_8, window_bounds = array<i64: 1, 512>}, {transform_indices = @transform_9, window_bounds = array<i64: 16, 512>}]} {
    %c0 = arith.constant 0 : index
    %c0_0 = arith.constant 0 : index
    %0 = vector.load %arg1[%c0, %c0_0] : memref<16x320xf32, #tpu.memory_space<vmem>>, vector<16x320xf32>
    %c0_1 = arith.constant 0 : index
    %c0_2 = arith.constant 0 : index
    %1 = vector.load %arg2[%c0_1, %c0_2] : memref<16x1xf32, #tpu.memory_space<vmem>>, vector<16x1xf32>
    %2 = vector.broadcast %1 : vector<16x1xf32> to vector<16x320xf32>
    %3 = arith.subf %0, %2 : vector<16x320xf32>
    %c0_3 = arith.constant 0 : index
    %c0_4 = arith.constant 0 : index
    %4 = vector.load %arg3[%c0_3, %c0_4] : memref<16x1xf32, #tpu.memory_space<vmem>>, vector<16x1xf32>
    %5 = vector.broadcast %4 : vector<16x1xf32> to vector<16x320xf32>
    %6 = arith.mulf %3, %5 : vector<16x320xf32>
    %7 = arith.truncf %6 : vector<16x320xf32> to vector<16x320xbf16>
    %c0_5 = arith.constant 0 : index
    %c0_6 = arith.constant 0 : index
    %8 = vector.load %arg4[%c0_5, %c0_6] : memref<320x512xbf16, #tpu.memory_space<vmem>>, vector<320x512xbf16>
    %cst = arith.constant dense<0.000000e+00> : vector<16x512xf32>
    %9 = tpu.matmul %7, %8, %cst {dimension_numbers = #tpu.dot_dimension_numbers<[1], [0], [0], [1], [0, 0, 1, 1], [], []>} : vector<16x320xbf16>, vector<320x512xbf16>, vector<16x512xf32> -> vector<16x512xf32>
    %c0_7 = arith.constant 0 : index
    %c0_8 = arith.constant 0 : index
    %10 = vector.load %arg5[%c0_7, %c0_8] : memref<1x512xf32, #tpu.memory_space<vmem>>, vector<1x512xf32>
    %11 = vector.broadcast %10 : vector<1x512xf32> to vector<16x512xf32>
    %12 = arith.addf %9, %11 : vector<16x512xf32>
    %cst_9 = arith.constant dense<0.000000e+00> : vector<16xf32>
    %13 = vector.multi_reduction <add>, %12, %cst_9 [1] : vector<16x512xf32> to vector<16xf32>
    %14 = vector.shape_cast %13 : vector<16xf32> to vector<16x1xf32>
    %cst_10 = arith.constant 5.120000e+02 : f32
    %15 = vector.broadcast %cst_10 : f32 to vector<16x1xf32>
    %16 = arith.divf %14, %15 : vector<16x1xf32>
    %17 = arith.mulf %12, %12 : vector<16x512xf32>
    %cst_11 = arith.constant dense<0.000000e+00> : vector<16xf32>
    %18 = vector.multi_reduction <add>, %17, %cst_11 [1] : vector<16x512xf32> to vector<16xf32>
    %19 = vector.shape_cast %18 : vector<16xf32> to vector<16x1xf32>
    %cst_12 = arith.constant 5.120000e+02 : f32
    %20 = vector.broadcast %cst_12 : f32 to vector<16x1xf32>
    %21 = arith.divf %19, %20 : vector<16x1xf32>
    %22 = arith.mulf %16, %16 : vector<16x1xf32>
    %23 = arith.subf %21, %22 : vector<16x1xf32>
    %cst_13 = arith.constant 0.000000e+00 : f32
    %24 = vector.broadcast %cst_13 : f32 to vector<16x1xf32>
    %25 = arith.maximumf %23, %24 : vector<16x1xf32>
    %26 = vector.broadcast %16 : vector<16x1xf32> to vector<16x512xf32>
    %27 = arith.subf %12, %26 : vector<16x512xf32>
    %cst_14 = arith.constant 9.99999974E-6 : f32
    %28 = vector.broadcast %cst_14 : f32 to vector<16x1xf32>
    %29 = arith.addf %25, %28 : vector<16x1xf32>
    %30 = math.rsqrt %29 : vector<16x1xf32>
    %31 = vector.broadcast %30 : vector<16x1xf32> to vector<16x512xf32>
    %32 = arith.mulf %27, %31 : vector<16x512xf32>
    %c0_15 = arith.constant 0 : index
    %c0_16 = arith.constant 0 : index
    %33 = vector.load %arg6[%c0_15, %c0_16] : memref<1x512xf32, #tpu.memory_space<vmem>>, vector<1x512xf32>
    %34 = vector.broadcast %33 : vector<1x512xf32> to vector<16x512xf32>
    %35 = arith.mulf %32, %34 : vector<16x512xf32>
    %c0_17 = arith.constant 0 : index
    %c0_18 = arith.constant 0 : index
    %36 = vector.load %arg7[%c0_17, %c0_18] : memref<1x512xf32, #tpu.memory_space<vmem>>, vector<1x512xf32>
    %37 = vector.broadcast %36 : vector<1x512xf32> to vector<16x512xf32>
    %38 = arith.addf %35, %37 : vector<16x512xf32>
    %39 = arith.truncf %38 : vector<16x512xf32> to vector<16x512xbf16>
    %c0_19 = arith.constant 0 : index
    %c0_20 = arith.constant 0 : index
    %40 = vector.load %arg8[%c0_19, %c0_20] : memref<512x512xbf16, #tpu.memory_space<vmem>>, vector<512x512xbf16>
    %cst_21 = arith.constant dense<0.000000e+00> : vector<16x512xf32>
    %41 = tpu.matmul %39, %40, %cst_21 {dimension_numbers = #tpu.dot_dimension_numbers<[1], [0], [0], [1], [0, 0, 1, 1], [], []>} : vector<16x512xbf16>, vector<512x512xbf16>, vector<16x512xf32> -> vector<16x512xf32>
    %c0_22 = arith.constant 0 : index
    %c0_23 = arith.constant 0 : index
    %42 = vector.load %arg9[%c0_22, %c0_23] : memref<1x512xf32, #tpu.memory_space<vmem>>, vector<1x512xf32>
    %43 = vector.broadcast %42 : vector<1x512xf32> to vector<16x512xf32>
    %44 = arith.addf %41, %43 : vector<16x512xf32>
    %c0_24 = arith.constant 0 : index
    %c0_25 = arith.constant 0 : index
    %45 = vector.load %arg10[%c0_24, %c0_25] : memref<16x512xf32, #tpu.memory_space<vmem>>, vector<16x512xf32>
    tpu.vector_store %arg10[%c0_24, %c0_25], %44 {strides = array<i32>} : memref<16x512xf32, #tpu.memory_space<vmem>>, vector<16x512xf32>,
    return
  }
  func.func @transform_0(%arg0: i32) -> (i32, i32) {
    %c0_i32 = arith.constant 0 : i32
    %c0_i32_0 = arith.constant 0 : i32
    return %arg0, %c0_i32 : i32, i32
  }
  func.func @transform_1(%arg0: i32) -> (i32, i32) {
    %c0_i32 = arith.constant 0 : i32
    %c0_i32_0 = arith.constant 0 : i32
    return %arg0, %c0_i32 : i32, i32
  }
  func.func @transform_2(%arg0: i32) -> (i32, i32) {
    %c0_i32 = arith.constant 0 : i32
    %c0_i32_0 = arith.constant 0 : i32
    return %arg0, %c0_i32 : i32, i32
  }
  func.func @transform_3(%arg0: i32) -> (i32, i32) {
    %c0_i32 = arith.constant 0 : i32
    %c0_i32_0 = arith.constant 0 : i32
    %c0_i32_1 = arith.constant 0 : i32
    return %c0_i32, %c0_i32_0 : i32, i32
  }
  func.func @transform_4(%arg0: i32) -> (i32, i32) {
    %c0_i32 = arith.constant 0 : i32
    %c0_i32_0 = arith.constant 0 : i32
    %c0_i32_1 = arith.constant 0 : i32
    return %c0_i32, %c0_i32_0 : i32, i32
  }
  func.func @transform_5(%arg0: i32) -> (i32, i32) {
    %c0_i32 = arith.constant 0 : i32
    %c0_i32_0 = arith.constant 0 : i32
    %c0_i32_1 = arith.constant 0 : i32
    return %c0_i32, %c0_i32_0 : i32, i32
  }
  func.func @transform_6(%arg0: i32) -> (i32, i32) {
    %c0_i32 = arith.constant 0 : i32
    %c0_i32_0 = arith.constant 0 : i32
    %c0_i32_1 = arith.constant 0 : i32
    return %c0_i32, %c0_i32_0 : i32, i32
  }
  func.func @transform_7(%arg0: i32) -> (i32, i32) {
    %c0_i32 = arith.constant 0 : i32
    %c0_i32_0 = arith.constant 0 : i32
    %c0_i32_1 = arith.constant 0 : i32
    return %c0_i32, %c0_i32_0 : i32, i32
  }
  func.func @transform_8(%arg0: i32) -> (i32, i32) {
    %c0_i32 = arith.constant 0 : i32
    %c0_i32_0 = arith.constant 0 : i32
    %c0_i32_1 = arith.constant 0 : i32
    return %c0_i32, %c0_i32_0 : i32, i32
  }
  func.func @transform_9(%arg0: i32) -> (i32, i32) {
    %c0_i32 = arith.constant 0 : i32
    %c0_i32_0 = arith.constant 0 : i32
    return %arg0, %c0_i32 : i32, i32
  }
}

</mosaic_0001>

<llo_original>
// kernel: tpu_custom_call.1
$region0: #{tpu_custom_call.1}
  #allocation0 [shape = 'u32[]', space=smem, size = 0x4, offset = 0x4, fixed_abs, tag = 'smem constant byte address 0x4 - core index']
  #allocation1 [shape = 'u32[144,128]{1,0:T(1,128)}', space=vmem, size = 0x12000, scoped, tag = 'internal scratch']
  %s0 = inlined_call_operand.hbm [shape: f32[16,320], index: 0, kind: input, shape index: {}]
  %s1 = inlined_call_operand.vmem [shape: f32[16,1], index: 1, kind: input, shape index: {}]
  %s2 = inlined_call_operand.vmem [shape: f32[16,1], index: 2, kind: input, shape index: {}]
  %s3 = inlined_call_operand.hbm [shape: bf16[320,512], index: 3, kind: input, shape index: {}]
  %s4 = inlined_call_operand.vmem [shape: f32[1,512], index: 4, kind: input, shape index: {}]
  %s5 = inlined_call_operand.vmem [shape: f32[1,512], index: 5, kind: input, shape index: {}]
  %s6 = inlined_call_operand.vmem [shape: f32[1,512], index: 6, kind: input, shape index: {}]
  %s7 = inlined_call_operand.hbm [shape: bf16[512,512], index: 7, kind: input, shape index: {}]
  %s8 = inlined_call_operand.vmem [shape: f32[1,512], index: 8, kind: input, shape index: {}]
  %s9 = inlined_call_operand.hbm [shape: f32[16,512], index: 9, kind: output, shape index: {}]
  %s10 = sld [smem:[#allocation0]]
  $region58: #{tpu_custom_call.1} parent=0
    _
  %s12 = ssub.s32 1, %s10
  %s13 = scalar_select 0, %s12, %s10
  $region1: #{tpu_custom_call.1} parent=0
    #allocation2 [shape = 'u8[24576]{0}', space=vmem, size = 0x6000, scoped, tag = 'input window, operand 0, single buffered']
    #allocation3 [shape = 's32[1]{0}', space=sflag, size = 0x4, scoped, tag = 'scoped memory for tpu_custom_call.1']
    #allocation4 [shape = 's32[1]{0}', space=sflag, size = 0x4, scoped, tag = 'scoped memory for tpu_custom_call.1']
    #allocation5 [shape = 'u8[327680]{0}', space=vmem, size = 0x50000, scoped, tag = 'input window, operand 3, single buffered']
    #allocation6 [shape = 's32[1]{0}', space=sflag, size = 0x4, scoped, tag = 'scoped memory for tpu_custom_call.1']
    #allocation7 [shape = 'u8[524288]{0}', space=vmem, size = 0x80000, scoped, tag = 'input window, operand 7, single buffered']
    #allocation8 [shape = 'u8[32768]{0}', space=vmem, size = 0x8000, scoped, tag = 'output window, operand 0, single buffered']
    %14 = vsyncpa [#allocation3], 0
    %15 = vsyncpa [#allocation6], 0
    %16 = vsyncpa [#allocation4], 0
    // Predicated region
    $region2: #{tpu_custom_call.1} parent=1 // pred_check
      _
    $region3: #{tpu_custom_call.1} parent=1 // pred_check_branch
      %18 = sbr.rel (0) target = $region5
    $region4: #{tpu_custom_call.1} parent=1 // pred_region
      %s20 = ssub.s32 768, 768
      %21 = vsyncadd [#allocation3], %s20
      %s22 = sshll.u32 [#allocation2], 4
      %s23 = int_to_ptr.vmem [resolvable:$true] %s22
      %28 = dma.hbm_to_vmem [thread:$0]  %s0, 768, %s23, [#allocation3], 384, 384, 24
    $region5: #{tpu_custom_call.1} parent=1 // pred_fallthru
      _
    // Predicated region
    $region6: #{tpu_custom_call.1} parent=1 // pred_check
      _
    $region7: #{tpu_custom_call.1} parent=1 // pred_check_branch
      %30 = sbr.rel (0) target = $region9
    $region8: #{tpu_custom_call.1} parent=1 // pred_region
      _
    $region9: #{tpu_custom_call.1} parent=1 // pred_fallthru
      _
    // Predicated region
    $region10: #{tpu_custom_call.1} parent=1 // pred_check
      _
    $region11: #{tpu_custom_call.1} parent=1 // pred_check_branch
      %32 = sbr.rel (0) target = $region13
    $region12: #{tpu_custom_call.1} parent=1 // pred_region
      _
    $region13: #{tpu_custom_call.1} parent=1 // pred_fallthru
      _
    // Predicated region
    $region14: #{tpu_custom_call.1} parent=1 // pred_check
      _
    $region15: #{tpu_custom_call.1} parent=1 // pred_check_branch
      %34 = sbr.rel (0) target = $region17
    $region16: #{tpu_custom_call.1} parent=1 // pred_region
      %s36 = ssub.s32 10240, 10240
      %37 = vsyncadd [#allocation6], %s36
      %s38 = sshll.u32 [#allocation5], 4
      %s39 = int_to_ptr.vmem [resolvable:$true] %s38
      %44 = dma.hbm_to_vmem [thread:$0]  %s3, 10240, %s39, [#allocation6], 256, 256, 16
    $region17: #{tpu_custom_call.1} parent=1 // pred_fallthru
      _
    // Predicated region
    $region18: #{tpu_custom_call.1} parent=1 // pred_check
      _
    $region19: #{tpu_custom_call.1} parent=1 // pred_check_branch
      %46 = sbr.rel (0) target = $region21
    $region20: #{tpu_custom_call.1} parent=1 // pred_region
      _
    $region21: #{tpu_custom_call.1} parent=1 // pred_fallthru
      _
    // Predicated region
    $region22: #{tpu_custom_call.1} parent=1 // pred_check
      _
    $region23: #{tpu_custom_call.1} parent=1 // pred_check_branch
      %48 = sbr.rel (0) target = $region25
    $region24: #{tpu_custom_call.1} parent=1 // pred_region
      _
    $region25: #{tpu_custom_call.1} parent=1 // pred_fallthru
      _
    // Predicated region
    $region26: #{tpu_custom_call.1} parent=1 // pred_check
      _
    $region27: #{tpu_custom_call.1} parent=1 // pred_check_branch
      %50 = sbr.rel (0) target = $region29
    $region28: #{tpu_custom_call.1} parent=1 // pred_region
      _
    $region29: #{tpu_custom_call.1} parent=1 // pred_fallthru
      _
    // Predicated region
    $region30: #{tpu_custom_call.1} parent=1 // pred_check
      _
    $region31: #{tpu_custom_call.1} parent=1 // pred_check_branch
      %52 = sbr.rel (0) target = $region33
    $region32: #{tpu_custom_call.1} parent=1 // pred_region
      %s54 = ssub.s32 16384, 16384
      %55 = vsyncadd [#allocation6], %s54
      %s56 = sshll.u32 [#allocation7], 4
      %s57 = int_to_ptr.vmem [resolvable:$true] %s56
      %62 = dma.hbm_to_vmem [thread:$0]  %s7, 16384, %s57, [#allocation6], 256, 256, 16
    $region33: #{tpu_custom_call.1} parent=1 // pred_fallthru
      _
    // Predicated region
    $region34: #{tpu_custom_call.1} parent=1 // pred_check
      _
    $region35: #{tpu_custom_call.1} parent=1 // pred_check_branch
      %64 = sbr.rel (0) target = $region37
    $region36: #{tpu_custom_call.1} parent=1 // pred_region
      _
    $region37: #{tpu_custom_call.1} parent=1 // pred_fallthru
      _
    // Predicated region
    $region38: #{tpu_custom_call.1} parent=1 // pred_check
      _
    $region39: #{tpu_custom_call.1} parent=1 // pred_check_branch
      %66 = sbr.rel (0) target = $region41
    $region40: #{tpu_custom_call.1} parent=1 // pred_region
      %67 = dma.done [#allocation3], 768
    $region41: #{tpu_custom_call.1} parent=1 // pred_fallthru
      _
    // Predicated region
    $region42: #{tpu_custom_call.1} parent=1 // pred_check
      _
    $region43: #{tpu_custom_call.1} parent=1 // pred_check_branch
      %69 = sbr.rel (0) target = $region45
    $region44: #{tpu_custom_call.1} parent=1 // pred_region
      %70 = dma.done [#allocation6], 10240
    $region45: #{tpu_custom_call.1} parent=1 // pred_fallthru
      _
    // Predicated region
    $region46: #{tpu_custom_call.1} parent=1 // pred_check
      _
    $region47: #{tpu_custom_call.1} parent=1 // pred_check_branch
      %72 = sbr.rel (0) target = $region49
    $region48: #{tpu_custom_call.1} parent=1 // pred_region
      %73 = dma.done [#allocation6], 16384
    $region49: #{tpu_custom_call.1} parent=1 // pred_fallthru
      _
    %v75 = vld [vmem:[#allocation2] sm:$0xff]
    %v76 = vld [vmem:[#allocation2 + $0x8] sm:$0xff]
    %v77 = vld [vmem:[#allocation2 + $0x10] sm:$0xff]
    %v78 = vld [vmem:[#allocation2 + $0x18] sm:$0xff]
    %v79 = vld [vmem:[#allocation2 + $0x20] sm:$0xff]
    %v80 = vld [vmem:[#allocation2 + $0x28] sm:$0xff]
    %v81 = vld [vmem:[%s1] sm:$0xff]
    %v82 = vld [vmem:[%s1 + $0x8] sm:$0xff]
    %84 = vset.pattern.permute.xlu0 0
    %85 = vperm.xlu0 %84, %v81
    %v86 = vpop.permute.xlu0 %85
    %89 = vset.pattern.permute.xlu0 0
    %90 = vperm.xlu0 %89, %v82
    %v91 = vpop.permute.xlu0 %90
    %v93 = vsub.f32 %v75, %v86
    %v94 = vsub.f32 %v76, %v86
    %v95 = vsub.f32 %v77, %v86
    %v96 = vsub.f32 %v78, %v91
    %v97 = vsub.f32 %v79, %v91
    %v98 = vsub.f32 %v80, %v91
    %v99 = vld [vmem:[%s2] sm:$0xff]
    %v100 = vld [vmem:[%s2 + $0x8] sm:$0xff]
    %102 = vset.pattern.permute.xlu0 0
    %103 = vperm.xlu0 %102, %v99
    %v104 = vpop.permute.xlu0 %103
    %107 = vset.pattern.permute.xlu0 0
    %108 = vperm.xlu0 %107, %v100
    %v109 = vpop.permute.xlu0 %108
    %v111 = vmul.f32 %v93, %v104
    %v112 = vmul.f32 %v94, %v104
    %v113 = vmul.f32 %v95, %v104
    %v114 = vmul.f32 %v96, %v109
    %v115 = vmul.f32 %v97, %v109
    %v116 = vmul.f32 %v98, %v109
    %v117 = vpack.c.bf16 %v114, %v111
    %v118 = vpack.c.bf16 %v115, %v112
    %v119 = vpack.c.bf16 %v116, %v113
    %v120 = vld [vmem:[#allocation5] sm:$0xff]
    %v121 = vld [vmem:[#allocation5 + $0x8] sm:$0xff]
    %v122 = vld [vmem:[#allocation5 + $0x10] sm:$0xff]
    %v123 = vld [vmem:[#allocation5 + $0x18] sm:$0xff]
    %v124 = vld [vmem:[#allocation5 + $0x20] sm:$0xff]
    %v125 = vld [vmem:[#allocation5 + $0x28] sm:$0xff]
    %v126 = vld [vmem:[#allocation5 + $0x30] sm:$0xff]
    %v127 = vld [vmem:[#allocation5 + $0x38] sm:$0xff]
    %v128 = vld [vmem:[#allocation5 + $0x40] sm:$0xff]
    %v129 = vld [vmem:[#allocation5 + $0x48] sm:$0xff]
    %v130 = vld [vmem:[#allocation5 + $0x50] sm:$0xff]
    %v131 = vld [vmem:[#allocation5 + $0x58] sm:$0xff]
    %v132 = vld [vmem:[#allocation5 + $0x60] sm:$0xff]
    %v133 = vld [vmem:[#allocation5 + $0x68] sm:$0xff]
    %v134 = vld [vmem:[#allocation5 + $0x70] sm:$0xff]
    %v135 = vld [vmem:[#allocation5 + $0x78] sm:$0xff]
    %v136 = vld [vmem:[#allocation5 + $0x80] sm:$0xff]
    %v137 = vld [vmem:[#allocation5 + $0x88] sm:$0xff]
    %v138 = vld [vmem:[#allocation5 + $0x90] sm:$0xff]
    %v139 = vld [vmem:[#allocation5 + $0x98] sm:$0xff]
    %v140 = vld [vmem:[#allocation5 + $0xa0] sm:$0xff]
    %v141 = vld [vmem:[#allocation5 + $0xa8] sm:$0xff]
    %v142 = vld [vmem:[#allocation5 + $0xb0] sm:$0xff]
    %v143 = vld [vmem:[#allocation5 + $0xb8] sm:$0xff]
    %v144 = vld [vmem:[#allocation5 + $0xc0] sm:$0xff]
    %v145 = vld [vmem:[#allocation5 + $0xc8] sm:$0xff]
    %v146 = vld [vmem:[#allocation5 + $0xd0] sm:$0xff]
    %v147 = vld [vmem:[#allocation5 + $0xd8] sm:$0xff]
    %v148 = vld [vmem:[#allocation5 + $0xe0] sm:$0xff]
    %v149 = vld [vmem:[#allocation5 + $0xe8] sm:$0xff]
    %v150 = vld [vmem:[#allocation5 + $0xf0] sm:$0xff]
    %v151 = vld [vmem:[#allocation5 + $0xf8] sm:$0xff]
    %v152 = vld [vmem:[#allocation5 + $0x100] sm:$0xff]
    %v153 = vld [vmem:[#allocation5 + $0x108] sm:$0xff]
    %v154 = vld [vmem:[#allocation5 + $0x110] sm:$0xff]
    %v155 = vld [vmem:[#allocation5 + $0x118] sm:$0xff]
    %v156 = vld [vmem:[#allocation5 + $0x120] sm:$0xff]
    %v157 = vld [vmem:[#allocation5 + $0x128] sm:$0xff]
    %v158 = vld [vmem:[#allocation5 + $0x130] sm:$0xff]
    %v159 = vld [vmem:[#allocation5 + $0x138] sm:$0xff]
    %v160 = vld [vmem:[#allocation5 + $0x140] sm:$0xff]
    %v161 = vld [vmem:[#allocation5 + $0x148] sm:$0xff]
    %v162 = vld [vmem:[#allocation5 + $0x150] sm:$0xff]
    %v163 = vld [vmem:[#allocation5 + $0x158] sm:$0xff]
    %v164 = vld [vmem:[#allocation5 + $0x160] sm:$0xff]
    %v165 = vld [vmem:[#allocation5 + $0x168] sm:$0xff]
    %v166 = vld [vmem:[#allocation5 + $0x170] sm:$0xff]
    %v167 = vld [vmem:[#allocation5 + $0x178] sm:$0xff]
    %v168 = vld [vmem:[#allocation5 + $0x180] sm:$0xff]
    %v169 = vld [vmem:[#allocation5 + $0x188] sm:$0xff]
    %v170 = vld [vmem:[#allocation5 + $0x190] sm:$0xff]
    %v171 = vld [vmem:[#allocation5 + $0x198] sm:$0xff]
    %v172 = vld [vmem:[#allocation5 + $0x1a0] sm:$0xff]
    %v173 = vld [vmem:[#allocation5 + $0x1a8] sm:$0xff]
    %v174 = vld [vmem:[#allocation5 + $0x1b0] sm:$0xff]
    %v175 = vld [vmem:[#allocation5 + $0x1b8] sm:$0xff]
    %v176 = vld [vmem:[#allocation5 + $0x1c0] sm:$0xff]
    %v177 = vld [vmem:[#allocation5 + $0x1c8] sm:$0xff]
    %v178 = vld [vmem:[#allocation5 + $0x1d0] sm:$0xff]
    %v179 = vld [vmem:[#allocation5 + $0x1d8] sm:$0xff]
    %v180 = vld [vmem:[#allocation5 + $0x1e0] sm:$0xff]
    %v181 = vld [vmem:[#allocation5 + $0x1e8] sm:$0xff]
    %v182 = vld [vmem:[#allocation5 + $0x1f0] sm:$0xff]
    %v183 = vld [vmem:[#allocation5 + $0x1f8] sm:$0xff]
    %v184 = vld [vmem:[#allocation5 + $0x200] sm:$0xff]
    %v185 = vld [vmem:[#allocation5 + $0x208] sm:$0xff]
    %v186 = vld [vmem:[#allocation5 + $0x210] sm:$0xff]
    %v187 = vld [vmem:[#allocation5 + $0x218] sm:$0xff]
    %v188 = vld [vmem:[#allocation5 + $0x220] sm:$0xff]
    %v189 = vld [vmem:[#allocation5 + $0x228] sm:$0xff]
    %v190 = vld [vmem:[#allocation5 + $0x230] sm:$0xff]
    %v191 = vld [vmem:[#allocation5 + $0x238] sm:$0xff]
    %v192 = vld [vmem:[#allocation5 + $0x240] sm:$0xff]
    %v193 = vld [vmem:[#allocation5 + $0x248] sm:$0xff]
    %v194 = vld [vmem:[#allocation5 + $0x250] sm:$0xff]
    %v195 = vld [vmem:[#allocation5 + $0x258] sm:$0xff]
    %v196 = vld [vmem:[#allocation5 + $0x260] sm:$0xff]
    %v197 = vld [vmem:[#allocation5 + $0x268] sm:$0xff]
    %v198 = vld [vmem:[#allocation5 + $0x270] sm:$0xff]
    %v199 = vld [vmem:[#allocation5 + $0x278] sm:$0xff]
    %v200 = vld [vmem:[%s4] sm:$0xf]
    %v202 = vlaneseq
    %v203 = vshrl.u32 %v202, 7
    %v204 = vsub.s32 0, %v203
    %v205 = vrot.slane %v200, %v204
    %v206 = vlaneseq
    %v207 = vshrl.u32 %v206, 7
    %v208 = vsub.s32 1, %v207
    %v209 = vrot.slane %v200, %v208
    %v210 = vlaneseq
    %v211 = vshrl.u32 %v210, 7
    %v212 = vsub.s32 2, %v211
    %v213 = vrot.slane %v200, %v212
    %v214 = vlaneseq
    %v215 = vshrl.u32 %v214, 7
    %v216 = vsub.s32 3, %v215
    %v217 = vrot.slane %v200, %v216
    %v302 = vunpack.c.l.b16 %v120
    %v303 = vunpack.c.h.b16 %v120
    %v304 = vunpack.c.l.b16 %v121
    %v305 = vunpack.c.h.b16 %v121
    %v306 = vunpack.c.l.b16 %v122
    %v307 = vunpack.c.h.b16 %v122
    %v308 = vunpack.c.l.b16 %v123
    %v309 = vunpack.c.h.b16 %v123
    %v310 = vunpack.c.l.b16 %v124
    %v311 = vunpack.c.h.b16 %v124
    %v312 = vunpack.c.l.b16 %v125
    %v313 = vunpack.c.h.b16 %v125
    %v314 = vunpack.c.l.b16 %v126
    %v315 = vunpack.c.h.b16 %v126
    %v316 = vunpack.c.l.b16 %v127
    %v317 = vunpack.c.h.b16 %v127
    %v318 = vunpack.c.l.b16 %v128
    %v319 = vunpack.c.h.b16 %v128
    %v320 = vunpack.c.l.b16 %v129
    %v321 = vunpack.c.h.b16 %v129
    %v322 = vunpack.c.l.b16 %v130
    %v323 = vunpack.c.h.b16 %v130
    %v324 = vunpack.c.l.b16 %v131
    %v325 = vunpack.c.h.b16 %v131
    %v326 = vunpack.c.l.b16 %v132
    %v327 = vunpack.c.h.b16 %v132
    %v328 = vunpack.c.l.b16 %v133
    %v329 = vunpack.c.h.b16 %v133
    %v330 = vunpack.c.l.b16 %v134
    %v331 = vunpack.c.h.b16 %v134
    %v332 = vunpack.c.l.b16 %v135
    %v333 = vunpack.c.h.b16 %v135
    %v334 = vunpack.c.l.b16 %v136
    %v335 = vunpack.c.h.b16 %v136
    %v336 = vunpack.c.l.b16 %v137
    %v337 = vunpack.c.h.b16 %v137
    %v338 = vunpack.c.l.b16 %v138
    %v339 = vunpack.c.h.b16 %v138
    %v340 = vunpack.c.l.b16 %v139
    %v341 = vunpack.c.h.b16 %v139
    %v342 = vunpack.c.l.b16 %v140
    %v343 = vunpack.c.h.b16 %v140
    %v344 = vunpack.c.l.b16 %v141
    %v345 = vunpack.c.h.b16 %v141
    %v346 = vunpack.c.l.b16 %v142
    %v347 = vunpack.c.h.b16 %v142
    %v348 = vunpack.c.l.b16 %v143
    %v349 = vunpack.c.h.b16 %v143
    %v350 = vunpack.c.l.b16 %v144
    %v351 = vunpack.c.h.b16 %v144
    %v352 = vunpack.c.l.b16 %v145
    %v353 = vunpack.c.h.b16 %v145
    %v354 = vunpack.c.l.b16 %v146
    %v355 = vunpack.c.h.b16 %v146
    %v356 = vunpack.c.l.b16 %v147
    %v357 = vunpack.c.h.b16 %v147
    %v358 = vunpack.c.l.b16 %v148
    %v359 = vunpack.c.h.b16 %v148
    %v360 = vunpack.c.l.b16 %v149
    %v361 = vunpack.c.h.b16 %v149
    %v362 = vunpack.c.l.b16 %v150
    %v363 = vunpack.c.h.b16 %v150
    %v364 = vunpack.c.l.b16 %v151
    %v365 = vunpack.c.h.b16 %v151
    %v366 = vunpack.c.l.b16 %v152
    %v367 = vunpack.c.h.b16 %v152
    %v368 = vunpack.c.l.b16 %v153
    %v369 = vunpack.c.h.b16 %v153
    %v370 = vunpack.c.l.b16 %v154
    %v371 = vunpack.c.h.b16 %v154
    %v372 = vunpack.c.l.b16 %v155
    %v373 = vunpack.c.h.b16 %v155
    %v374 = vunpack.c.l.b16 %v156
    %v375 = vunpack.c.h.b16 %v156
    %v376 = vunpack.c.l.b16 %v157
    %v377 = vunpack.c.h.b16 %v157
    %v378 = vunpack.c.l.b16 %v158
    %v379 = vunpack.c.h.b16 %v158
    %v380 = vunpack.c.l.b16 %v159
    %v381 = vunpack.c.h.b16 %v159
    %v382 = vunpack.c.l.b16 %v160
    %v383 = vunpack.c.h.b16 %v160
    %v384 = vunpack.c.l.b16 %v161
    %v385 = vunpack.c.h.b16 %v161
    %v386 = vunpack.c.l.b16 %v162
    %v387 = vunpack.c.h.b16 %v162
    %v388 = vunpack.c.l.b16 %v163
    %v389 = vunpack.c.h.b16 %v163
    %v390 = vunpack.c.l.b16 %v164
    %v391 = vunpack.c.h.b16 %v164
    %v392 = vunpack.c.l.b16 %v165
    %v393 = vunpack.c.h.b16 %v165
    %v394 = vunpack.c.l.b16 %v166
    %v395 = vunpack.c.h.b16 %v166
    %v396 = vunpack.c.l.b16 %v167
    %v397 = vunpack.c.h.b16 %v167
    %v398 = vunpack.c.l.b16 %v168
    %v399 = vunpack.c.h.b16 %v168
    %v400 = vunpack.c.l.b16 %v169
    %v401 = vunpack.c.h.b16 %v169
    %v402 = vunpack.c.l.b16 %v170
    %v403 = vunpack.c.h.b16 %v170
    %v404 = vunpack.c.l.b16 %v171
    %v405 = vunpack.c.h.b16 %v171
    %v406 = vunpack.c.l.b16 %v172
    %v407 = vunpack.c.h.b16 %v172
    %v408 = vunpack.c.l.b16 %v173
    %v409 = vunpack.c.h.b16 %v173
    %v410 = vunpack.c.l.b16 %v174
    %v411 = vunpack.c.h.b16 %v174
    %v412 = vunpack.c.l.b16 %v175
    %v413 = vunpack.c.h.b16 %v175
    %v414 = vunpack.c.l.b16 %v176
    %v415 = vunpack.c.h.b16 %v176
    %v416 = vunpack.c.l.b16 %v177
    %v417 = vunpack.c.h.b16 %v177
    %v418 = vunpack.c.l.b16 %v178
    %v419 = vunpack.c.h.b16 %v178
    %v420 = vunpack.c.l.b16 %v179
    %v421 = vunpack.c.h.b16 %v179
    %v422 = vunpack.c.l.b16 %v180
    %v423 = vunpack.c.h.b16 %v180
    %v424 = vunpack.c.l.b16 %v181
    %v425 = vunpack.c.h.b16 %v181
    %v426 = vunpack.c.l.b16 %v182
    %v427 = vunpack.c.h.b16 %v182
    %v428 = vunpack.c.l.b16 %v183
    %v429 = vunpack.c.h.b16 %v183
    %v430 = vunpack.c.l.b16 %v184
    %v431 = vunpack.c.h.b16 %v184
    %v432 = vunpack.c.l.b16 %v185
    %v433 = vunpack.c.h.b16 %v185
    %v434 = vunpack.c.l.b16 %v186
    %v435 = vunpack.c.h.b16 %v186
    %v436 = vunpack.c.l.b16 %v187
    %v437 = vunpack.c.h.b16 %v187
    %v438 = vunpack.c.l.b16 %v188
    %v439 = vunpack.c.h.b16 %v188
    %v440 = vunpack.c.l.b16 %v189
    %v441 = vunpack.c.h.b16 %v189
    %v442 = vunpack.c.l.b16 %v190
    %v443 = vunpack.c.h.b16 %v190
    %v444 = vunpack.c.l.b16 %v191
    %v445 = vunpack.c.h.b16 %v191
    %v446 = vunpack.c.l.b16 %v192
    %v447 = vunpack.c.h.b16 %v192
    %v448 = vunpack.c.l.b16 %v193
    %v449 = vunpack.c.h.b16 %v193
    %v450 = vunpack.c.l.b16 %v194
    %v451 = vunpack.c.h.b16 %v194
    %v452 = vunpack.c.l.b16 %v195
    %v453 = vunpack.c.h.b16 %v195
    %v454 = vunpack.c.l.b16 %v196
    %v455 = vunpack.c.h.b16 %v196
    %v456 = vunpack.c.l.b16 %v197
    %v457 = vunpack.c.h.b16 %v197
    %v458 = vunpack.c.l.b16 %v198
    %v459 = vunpack.c.h.b16 %v198
    %v460 = vunpack.c.l.b16 %v199
    %v461 = vunpack.c.h.b16 %v199
    %v462 = vpack.c.b16 %v306, %v302
    %v463 = vpack.c.b16 %v307, %v303
    %v464 = vpack.c.b16 %v308, %v304
    %v465 = vpack.c.b16 %v309, %v305
    %v466 = vpack.c.b16 %v314, %v310
    %v467 = vpack.c.b16 %v315, %v311
    %v468 = vpack.c.b16 %v316, %v312
    %v469 = vpack.c.b16 %v317, %v313
    %v470 = vpack.c.b16 %v322, %v318
    %v471 = vpack.c.b16 %v323, %v319
    %v472 = vpack.c.b16 %v324, %v320
    %v473 = vpack.c.b16 %v325, %v321
    %v474 = vpack.c.b16 %v330, %v326
    %v475 = vpack.c.b16 %v331, %v327
    %v476 = vpack.c.b16 %v332, %v328
    %v477 = vpack.c.b16 %v333, %v329
    %v478 = vpack.c.b16 %v338, %v334
    %v479 = vpack.c.b16 %v339, %v335
    %v480 = vpack.c.b16 %v340, %v336
    %v481 = vpack.c.b16 %v341, %v337
    %v482 = vpack.c.b16 %v346, %v342
    %v483 = vpack.c.b16 %v347, %v343
    %v484 = vpack.c.b16 %v348, %v344
    %v485 = vpack.c.b16 %v349, %v345
    %v486 = vpack.c.b16 %v354, %v350
    %v487 = vpack.c.b16 %v355, %v351
    %v488 = vpack.c.b16 %v356, %v352
    %v489 = vpack.c.b16 %v357, %v353
    %v490 = vpack.c.b16 %v362, %v358
    %v491 = vpack.c.b16 %v363, %v359
    %v492 = vpack.c.b16 %v364, %v360
    %v493 = vpack.c.b16 %v365, %v361
    %v494 = vpack.c.b16 %v370, %v366
    %v495 = vpack.c.b16 %v371, %v367
    %v496 = vpack.c.b16 %v372, %v368
    %v497 = vpack.c.b16 %v373, %v369
    %v498 = vpack.c.b16 %v378, %v374
    %v499 = vpack.c.b16 %v379, %v375
    %v500 = vpack.c.b16 %v380, %v376
    %v501 = vpack.c.b16 %v381, %v377
    %v502 = vpack.c.b16 %v386, %v382
    %v503 = vpack.c.b16 %v387, %v383
    %v504 = vpack.c.b16 %v388, %v384
    %v505 = vpack.c.b16 %v389, %v385
    %v506 = vpack.c.b16 %v394, %v390
    %v507 = vpack.c.b16 %v395, %v391
    %v508 = vpack.c.b16 %v396, %v392
    %v509 = vpack.c.b16 %v397, %v393
    %v510 = vpack.c.b16 %v402, %v398
    %v511 = vpack.c.b16 %v403, %v399
    %v512 = vpack.c.b16 %v404, %v400
    %v513 = vpack.c.b16 %v405, %v401
    %v514 = vpack.c.b16 %v410, %v406
    %v515 = vpack.c.b16 %v411, %v407
    %v516 = vpack.c.b16 %v412, %v408
    %v517 = vpack.c.b16 %v413, %v409
    %v518 = vpack.c.b16 %v418, %v414
    %v519 = vpack.c.b16 %v419, %v415
    %v520 = vpack.c.b16 %v420, %v416
    %v521 = vpack.c.b16 %v421, %v417
    %v522 = vpack.c.b16 %v426, %v422
    %v523 = vpack.c.b16 %v427, %v423
    %v524 = vpack.c.b16 %v428, %v424
    %v525 = vpack.c.b16 %v429, %v425
    %v526 = vpack.c.b16 %v434, %v430
    %v527 = vpack.c.b16 %v435, %v431
    %v528 = vpack.c.b16 %v436, %v432
    %v529 = vpack.c.b16 %v437, %v433
    %v530 = vpack.c.b16 %v442, %v438
    %v531 = vpack.c.b16 %v443, %v439
    %v532 = vpack.c.b16 %v444, %v440
    %v533 = vpack.c.b16 %v445, %v441
    %v534 = vpack.c.b16 %v450, %v446
    %v535 = vpack.c.b16 %v451, %v447
    %v536 = vpack.c.b16 %v452, %v448
    %v537 = vpack.c.b16 %v453, %v449
    %v538 = vpack.c.b16 %v458, %v454
    %v539 = vpack.c.b16 %v459, %v455
    %v540 = vpack.c.b16 %v460, %v456
    %v541 = vpack.c.b16 %v461, %v457
    %vm622 = vcmask 523264
    %v624 = vsel %vm622, %v119, 0
    %626 = vmatprep.subr.bf16.mxu0 %v463
    %627 = vmatpush1.bf16.msra.mxu0 %v462
    %628 = vmatprep.subr.bf16.mxu0 %v467
    %629 = vmatpush1.bf16.msra.mxu0 %v466
    %630 = vmatprep.subr.bf16.mxu0 %v471
    %631 = vmatpush1.bf16.msra.mxu0 %v470
    %632 = vmatprep.subr.bf16.mxu0 %v475
    %633 = vmatpush1.bf16.msra.mxu0 %v474
    %634 = vmatprep.subr.bf16.mxu0 %v479
    %635 = vmatpush1.bf16.msra.mxu0 %v478
    %636 = vmatprep.subr.bf16.mxu0 %v483
    %637 = vmatpush1.bf16.msra.mxu0 %v482
    %638 = vmatprep.subr.bf16.mxu0 %v487
    %639 = vmatpush1.bf16.msra.mxu0 %v486
    %640 = vmatprep.subr.bf16.mxu0 %v491
    %641 = vmatpush1.bf16.msra.mxu0 %v490
    %642 = vmatprep.subr.bf16.mxu0 %v495
    %643 = vmatpush1.bf16.msra.mxu0 %v494
    %644 = vmatprep.subr.bf16.mxu0 %v499
    %645 = vmatpush1.bf16.msra.mxu0 %v498
    %646 = vmatprep.subr.bf16.mxu0 %v503
    %647 = vmatpush1.bf16.msra.mxu0 %v502
    %648 = vmatprep.subr.bf16.mxu0 %v507
    %649 = vmatpush1.bf16.msra.mxu0 %v506
    %650 = vmatprep.subr.bf16.mxu0 %v511
    %651 = vmatpush1.bf16.msra.mxu0 %v510
    %652 = vmatprep.subr.bf16.mxu0 %v515
    %653 = vmatpush1.bf16.msra.mxu0 %v514
    %654 = vmatprep.subr.bf16.mxu0 %v519
    %655 = vmatpush1.bf16.msra.mxu0 %v518
    %656 = vmatprep.subr.bf16.mxu0 %v523
    %657 = vmatpush1.bf16.msra.mxu0 %v522
    %658 = vmatprep.mubr.bf16.mxu0 %v118
    %659 = vmatmul.mubr.bf16.gmra.mrb[0].mxu0 %v117
    %v660 = vpop.f32.mrb[0].mxu0
    %v661 = vadd.f32 %v205, %v660
    %v662 = vpop.f32.mrb[0].mxu0
    %v663 = vadd.f32 %v209, %v662
    %v664 = vpop.f32.mrb[0].mxu0
    %v665 = vadd.f32 %v205, %v664
    %v666 = vpop.f32.mrb[0].mxu0
    %v667 = vadd.f32 %v209, %v666
    %668 = vdwg.mxu0
    %669 = vmatprep.subr.bf16.mxu0 %v527
    %670 = vmatpush1.bf16.msra.mxu0 %v526
    %671 = vmatprep.subr.bf16.mxu0 %v531
    %672 = vmatpush1.bf16.msra.mxu0 %v530
    %673 = vmatprep.subr.bf16.mxu0 %v535
    %674 = vmatpush1.bf16.msra.mxu0 %v534
    %675 = vmatprep.subr.bf16.mxu0 %v539
    %676 = vmatpush1.bf16.msra.mxu0 %v538
    %677 = vmatprep.subr.bf16.mxu0 0
    %678 = vmatpush1.bf16.msra.mxu0 0
    %679 = vmatprep.subr.bf16.mxu0 0
    %680 = vmatpush1.bf16.msra.mxu0 0
    %681 = vmatprep.subr.bf16.mxu0 0
    %682 = vmatpush1.bf16.msra.mxu0 0
    %683 = vmatprep.subr.bf16.mxu0 0
    %684 = vmatpush1.bf16.msra.mxu0 0
    %685 = vmatprep.subr.bf16.mxu0 0
    %686 = vmatpush1.bf16.msra.mxu0 0
    %687 = vmatprep.subr.bf16.mxu0 0
    %688 = vmatpush1.bf16.msra.mxu0 0
    %689 = vmatprep.subr.bf16.mxu0 0
    %690 = vmatpush1.bf16.msra.mxu0 0
    %691 = vmatprep.subr.bf16.mxu0 0
    %692 = vmatpush1.bf16.msra.mxu0 0
    %693 = vmatprep.subr.bf16.mxu0 0
    %694 = vmatpush1.bf16.msra.mxu0 0
    %695 = vmatprep.subr.bf16.mxu0 0
    %696 = vmatpush1.bf16.msra.mxu0 0
    %697 = vmatprep.subr.bf16.mxu0 0
    %698 = vmatpush1.bf16.msra.mxu0 0
    %699 = vmatprep.subr.bf16.mxu0 0
    %700 = vmatpush1.bf16.msra.mxu0 0
    %701 = vmatprep.mubr.bf16.mxu0 0
    %702 = vmatmul.mubr.bf16.gmra.mrb[0].mxu0 %v624
    %v703 = vpop.f32.mrb[0].mxu0
    %v704 = vadd.f32 %v661, %v703
    %v705 = vpop.f32.mrb[0].mxu0
    %v706 = vadd.f32 %v663, %v705
    %v707 = vpop.f32.mrb[0].mxu0
    %v708 = vadd.f32 %v665, %v707
    %v709 = vpop.f32.mrb[0].mxu0
    %v710 = vadd.f32 %v667, %v709
    %711 = vdwg.mxu0
    %712 = vmatprep.subr.bf16.mxu0 %v465
    %713 = vmatpush1.bf16.msra.mxu0 %v464
    %714 = vmatprep.subr.bf16.mxu0 %v469
    %715 = vmatpush1.bf16.msra.mxu0 %v468
    %716 = vmatprep.subr.bf16.mxu0 %v473
    %717 = vmatpush1.bf16.msra.mxu0 %v472
    %718 = vmatprep.subr.bf16.mxu0 %v477
    %719 = vmatpush1.bf16.msra.mxu0 %v476
    %720 = vmatprep.subr.bf16.mxu0 %v481
    %721 = vmatpush1.bf16.msra.mxu0 %v480
    %722 = vmatprep.subr.bf16.mxu0 %v485
    %723 = vmatpush1.bf16.msra.mxu0 %v484
    %724 = vmatprep.subr.bf16.mxu0 %v489
    %725 = vmatpush1.bf16.msra.mxu0 %v488
    %726 = vmatprep.subr.bf16.mxu0 %v493
    %727 = vmatpush1.bf16.msra.mxu0 %v492
    %728 = vmatprep.subr.bf16.mxu0 %v497
    %729 = vmatpush1.bf16.msra.mxu0 %v496
    %730 = vmatprep.subr.bf16.mxu0 %v501
    %731 = vmatpush1.bf16.msra.mxu0 %v500
    %732 = vmatprep.subr.bf16.mxu0 %v505
    %733 = vmatpush1.bf16.msra.mxu0 %v504
    %734 = vmatprep.subr.bf16.mxu0 %v509
    %735 = vmatpush1.bf16.msra.mxu0 %v508
    %736 = vmatprep.subr.bf16.mxu0 %v513
    %737 = vmatpush1.bf16.msra.mxu0 %v512
    %738 = vmatprep.subr.bf16.mxu0 %v517
    %739 = vmatpush1.bf16.msra.mxu0 %v516
    %740 = vmatprep.subr.bf16.mxu0 %v521
    %741 = vmatpush1.bf16.msra.mxu0 %v520
    %742 = vmatprep.subr.bf16.mxu0 %v525
    %743 = vmatpush1.bf16.msra.mxu0 %v524
    %744 = vmatprep.mubr.bf16.mxu0 %v118
    %745 = vmatmul.mubr.bf16.gmra.mrb[0].mxu0 %v117
    %v746 = vpop.f32.mrb[0].mxu0
    %v747 = vadd.f32 %v213, %v746
    %v748 = vpop.f32.mrb[0].mxu0
    %v749 = vadd.f32 %v217, %v748
    %v750 = vpop.f32.mrb[0].mxu0
    %v751 = vadd.f32 %v213, %v750
    %v752 = vpop.f32.mrb[0].mxu0
    %v753 = vadd.f32 %v217, %v752
    %754 = vdwg.mxu0
    %755 = vmatprep.subr.bf16.mxu0 %v529
    %756 = vmatpush1.bf16.msra.mxu0 %v528
    %757 = vmatprep.subr.bf16.mxu0 %v533
    %758 = vmatpush1.bf16.msra.mxu0 %v532
    %759 = vmatprep.subr.bf16.mxu0 %v537
    %760 = vmatpush1.bf16.msra.mxu0 %v536
    %761 = vmatprep.subr.bf16.mxu0 %v541
    %762 = vmatpush1.bf16.msra.mxu0 %v540
    %763 = vmatprep.subr.bf16.mxu0 0
    %764 = vmatpush1.bf16.msra.mxu0 0
    %765 = vmatprep.subr.bf16.mxu0 0
    %766 = vmatpush1.bf16.msra.mxu0 0
    %767 = vmatprep.subr.bf16.mxu0 0
    %768 = vmatpush1.bf16.msra.mxu0 0
    %769 = vmatprep.subr.bf16.mxu0 0
    %770 = vmatpush1.bf16.msra.mxu0 0
    %771 = vmatprep.subr.bf16.mxu0 0
    %772 = vmatpush1.bf16.msra.mxu0 0
    %773 = vmatprep.subr.bf16.mxu0 0
    %774 = vmatpush1.bf16.msra.mxu0 0
    %775 = vmatprep.subr.bf16.mxu0 0
    %776 = vmatpush1.bf16.msra.mxu0 0
    %777 = vmatprep.subr.bf16.mxu0 0
    %778 = vmatpush1.bf16.msra.mxu0 0
    %779 = vmatprep.subr.bf16.mxu0 0
    %780 = vmatpush1.bf16.msra.mxu0 0
    %781 = vmatprep.subr.bf16.mxu0 0
    %782 = vmatpush1.bf16.msra.mxu0 0
    %783 = vmatprep.subr.bf16.mxu0 0
    %784 = vmatpush1.bf16.msra.mxu0 0
    %785 = vmatprep.subr.bf16.mxu0 0
    %786 = vmatpush1.bf16.msra.mxu0 0
    %787 = vmatprep.mubr.bf16.mxu0 0
    %788 = vmatmul.mubr.bf16.gmra.mrb[0].mxu0 %v624
    %v789 = vpop.f32.mrb[0].mxu0
    %v790 = vadd.f32 %v747, %v789
    %v791 = vpop.f32.mrb[0].mxu0
    %v792 = vadd.f32 %v749, %v791
    %v793 = vpop.f32.mrb[0].mxu0
    %v794 = vadd.f32 %v751, %v793
    %v795 = vpop.f32.mrb[0].mxu0
    %v796 = vadd.f32 %v753, %v795
    %797 = vdwg.mxu0
    %v798 = vadd.f32 %v704, %v706
    %v799 = vadd.f32 %v798, %v790
    %v800 = vadd.f32 %v799, %v792
    %801 = vadd.xlane.f32.xlu0 %v800
    %v802 = vpop.xlane.xlu0 %801
    %v803 = vadd.f32 %v708, %v710
    %v804 = vadd.f32 %v803, %v794
    %v805 = vadd.f32 %v804, %v796
    %806 = vadd.xlane.f32.xlu0 %v805
    %v807 = vpop.xlane.xlu0 %806
    %v808 = vrcp.pop 512.0
    %v809 = vmul.f32 %v802, %v808
    %v810 = vmul.f32 %v807, %v808
    %v811 = vmul.f32 %v704, %v704
    %v812 = vmul.f32 %v706, %v706
    %v813 = vmul.f32 %v790, %v790
    %v814 = vmul.f32 %v792, %v792
    %v815 = vmul.f32 %v708, %v708
    %v816 = vmul.f32 %v710, %v710
    %v817 = vmul.f32 %v794, %v794
    %v818 = vmul.f32 %v796, %v796
    %v819 = vadd.f32 %v811, %v812
    %v820 = vadd.f32 %v819, %v813
    %v821 = vadd.f32 %v820, %v814
    %822 = vadd.xlane.f32.xlu0 %v821
    %v823 = vpop.xlane.xlu0 %822
    %v824 = vadd.f32 %v815, %v816
    %v825 = vadd.f32 %v824, %v817
    %v826 = vadd.f32 %v825, %v818
    %827 = vadd.xlane.f32.xlu0 %v826
    %v828 = vpop.xlane.xlu0 %827
    %v829 = vmul.f32 %v823, %v808
    %v830 = vmul.f32 %v828, %v808
    %v831 = vmul.f32 %v809, %v809
    %v832 = vmul.f32 %v810, %v810
    %v833 = vsub.f32 %v829, %v831
    %v834 = vsub.f32 %v830, %v832
    %v835 = vmax.f32 %v833, 0.0
    %v836 = vmax.f32 %v834, 0.0
    %v837 = vsub.f32 %v704, %v809
    %v838 = vsub.f32 %v706, %v809
    %v839 = vsub.f32 %v790, %v809
    %v840 = vsub.f32 %v792, %v809
    %v841 = vsub.f32 %v708, %v810
    %v842 = vsub.f32 %v710, %v810
    %v843 = vsub.f32 %v794, %v810
    %v844 = vsub.f32 %v796, %v810
    %v845 = vadd.f32 %v835, 1e-05
    %v846 = vadd.f32 %v836, 1e-05
    %v847 = vrsqrt.pop %v845
    %v848 = vrsqrt.pop %v846
    %v849 = vmul.f32 %v837, %v847
    %v850 = vmul.f32 %v838, %v847
    %v851 = vmul.f32 %v839, %v847
    %v852 = vmul.f32 %v840, %v847
    %v853 = vmul.f32 %v841, %v848
    %v854 = vmul.f32 %v842, %v848
    %v855 = vmul.f32 %v843, %v848
    %v856 = vmul.f32 %v844, %v848
    %v857 = vld [vmem:[%s5] sm:$0xf]
    %v859 = vlaneseq
    %v860 = vshrl.u32 %v859, 7
    %v861 = vsub.s32 0, %v860
    %v862 = vrot.slane %v857, %v861
    %v863 = vlaneseq
    %v864 = vshrl.u32 %v863, 7
    %v865 = vsub.s32 1, %v864
    %v866 = vrot.slane %v857, %v865
    %v867 = vlaneseq
    %v868 = vshrl.u32 %v867, 7
    %v869 = vsub.s32 2, %v868
    %v870 = vrot.slane %v857, %v869
    %v871 = vlaneseq
    %v872 = vshrl.u32 %v871, 7
    %v873 = vsub.s32 3, %v872
    %v874 = vrot.slane %v857, %v873
    %v879 = vmul.f32 %v849, %v862
    %v880 = vmul.f32 %v850, %v866
    %v881 = vmul.f32 %v851, %v870
    %v882 = vmul.f32 %v852, %v874
    %v883 = vmul.f32 %v853, %v862
    %v884 = vmul.f32 %v854, %v866
    %v885 = vmul.f32 %v855, %v870
    %v886 = vmul.f32 %v856, %v874
    %v887 = vld [vmem:[%s6] sm:$0xf]
    %v889 = vlaneseq
    %v890 = vshrl.u32 %v889, 7
    %v891 = vsub.s32 0, %v890
    %v892 = vrot.slane %v887, %v891
    %v893 = vlaneseq
    %v894 = vshrl.u32 %v893, 7
    %v895 = vsub.s32 1, %v894
    %v896 = vrot.slane %v887, %v895
    %v897 = vlaneseq
    %v898 = vshrl.u32 %v897, 7
    %v899 = vsub.s32 2, %v898
    %v900 = vrot.slane %v887, %v899
    %v901 = vlaneseq
    %v902 = vshrl.u32 %v901, 7
    %v903 = vsub.s32 3, %v902
    %v904 = vrot.slane %v887, %v903
    %v909 = vadd.f32 %v879, %v892
    %v910 = vadd.f32 %v880, %v896
    %v911 = vadd.f32 %v881, %v900
    %v912 = vadd.f32 %v882, %v904
    %v913 = vadd.f32 %v883, %v892
    %v914 = vadd.f32 %v884, %v896
    %v915 = vadd.f32 %v885, %v900
    %v916 = vadd.f32 %v886, %v904
    %v917 = vpack.c.bf16 %v913, %v909
    %v918 = vpack.c.bf16 %v914, %v910
    %v919 = vpack.c.bf16 %v915, %v911
    %v920 = vpack.c.bf16 %v916, %v912
    %v921 = vld [vmem:[#allocation7] sm:$0xff]
    %v922 = vld [vmem:[#allocation7 + $0x8] sm:$0xff]
    %v923 = vld [vmem:[#allocation7 + $0x10] sm:$0xff]
    %v924 = vld [vmem:[#allocation7 + $0x18] sm:$0xff]
    %v925 = vld [vmem:[#allocation7 + $0x20] sm:$0xff]
    %v926 = vld [vmem:[#allocation7 + $0x28] sm:$0xff]
    %v927 = vld [vmem:[#allocation7 + $0x30] sm:$0xff]
    %v928 = vld [vmem:[#allocation7 + $0x38] sm:$0xff]
    %v929 = vld [vmem:[#allocation7 + $0x40] sm:$0xff]
    %v930 = vld [vmem:[#allocation7 + $0x48] sm:$0xff]
    %v931 = vld [vmem:[#allocation7 + $0x50] sm:$0xff]
    %v932 = vld [vmem:[#allocation7 + $0x58] sm:$0xff]
    %v933 = vld [vmem:[#allocation7 + $0x60] sm:$0xff]
    %v934 = vld [vmem:[#allocation7 + $0x68] sm:$0xff]
    %v935 = vld [vmem:[#allocation7 + $0x70] sm:$0xff]
    %v936 = vld [vmem:[#allocation7 + $0x78] sm:$0xff]
    %v937 = vld [vmem:[#allocation7 + $0x80] sm:$0xff]
    %v938 = vld [vmem:[#allocation7 + $0x88] sm:$0xff]
    %v939 = vld [vmem:[#allocation7 + $0x90] sm:$0xff]
    %v940 = vld [vmem:[#allocation7 + $0x98] sm:$0xff]
    %v941 = vld [vmem:[#allocation7 + $0xa0] sm:$0xff]
    %v942 = vld [vmem:[#allocation7 + $0xa8] sm:$0xff]
    %v943 = vld [vmem:[#allocation7 + $0xb0] sm:$0xff]
    %v944 = vld [vmem:[#allocation7 + $0xb8] sm:$0xff]
    %v945 = vld [vmem:[#allocation7 + $0xc0] sm:$0xff]
    %v946 = vld [vmem:[#allocation7 + $0xc8] sm:$0xff]
    %v947 = vld [vmem:[#allocation7 + $0xd0] sm:$0xff]
    %v948 = vld [vmem:[#allocation7 + $0xd8] sm:$0xff]
    %v949 = vld [vmem:[#allocation7 + $0xe0] sm:$0xff]
    %v950 = vld [vmem:[#allocation7 + $0xe8] sm:$0xff]
    %v951 = vld [vmem:[#allocation7 + $0xf0] sm:$0xff]
    %v952 = vld [vmem:[#allocation7 + $0xf8] sm:$0xff]
    %v953 = vld [vmem:[#allocation7 + $0x100] sm:$0xff]
    %v954 = vld [vmem:[#allocation7 + $0x108] sm:$0xff]
    %v955 = vld [vmem:[#allocation7 + $0x110] sm:$0xff]
    %v956 = vld [vmem:[#allocation7 + $0x118] sm:$0xff]
    %v957 = vld [vmem:[#allocation7 + $0x120] sm:$0xff]
    %v958 = vld [vmem:[#allocation7 + $0x128] sm:$0xff]
    %v959 = vld [vmem:[#allocation7 + $0x130] sm:$0xff]
    %v960 = vld [vmem:[#allocation7 + $0x138] sm:$0xff]
    %v961 = vld [vmem:[#allocation7 + $0x140] sm:$0xff]
    %v962 = vld [vmem:[#allocation7 + $0x148] sm:$0xff]
    %v963 = vld [vmem:[#allocation7 + $0x150] sm:$0xff]
    %v964 = vld [vmem:[#allocation7 + $0x158] sm:$0xff]
    %v965 = vld [vmem:[#allocation7 + $0x160] sm:$0xff]
    %v966 = vld [vmem:[#allocation7 + $0x168] sm:$0xff]
    %v967 = vld [vmem:[#allocation7 + $0x170] sm:$0xff]
    %v968 = vld [vmem:[#allocation7 + $0x178] sm:$0xff]
    %v969 = vld [vmem:[#allocation7 + $0x180] sm:$0xff]
    %v970 = vld [vmem:[#allocation7 + $0x188] sm:$0xff]
    %v971 = vld [vmem:[#allocation7 + $0x190] sm:$0xff]
    %v972 = vld [vmem:[#allocation7 + $0x198] sm:$0xff]
    %v973 = vld [vmem:[#allocation7 + $0x1a0] sm:$0xff]
    %v974 = vld [vmem:[#allocation7 + $0x1a8] sm:$0xff]
    %v975 = vld [vmem:[#allocation7 + $0x1b0] sm:$0xff]
    %v976 = vld [vmem:[#allocation7 + $0x1b8] sm:$0xff]
    %v977 = vld [vmem:[#allocation7 + $0x1c0] sm:$0xff]
    %v978 = vld [vmem:[#allocation7 + $0x1c8] sm:$0xff]
    %v979 = vld [vmem:[#allocation7 + $0x1d0] sm:$0xff]
    %v980 = vld [vmem:[#allocation7 + $0x1d8] sm:$0xff]
    %v981 = vld [vmem:[#allocation7 + $0x1e0] sm:$0xff]
    %v982 = vld [vmem:[#allocation7 + $0x1e8] sm:$0xff]
    %v983 = vld [vmem:[#allocation7 + $0x1f0] sm:$0xff]
    %v984 = vld [vmem:[#allocation7 + $0x1f8] sm:$0xff]
    %v985 = vld [vmem:[#allocation7 + $0x200] sm:$0xff]
    %v986 = vld [vmem:[#allocation7 + $0x208] sm:$0xff]
    %v987 = vld [vmem:[#allocation7 + $0x210] sm:$0xff]
    %v988 = vld [vmem:[#allocation7 + $0x218] sm:$0xff]
    %v989 = vld [vmem:[#allocation7 + $0x220] sm:$0xff]
    %v990 = vld [vmem:[#allocation7 + $0x228] sm:$0xff]
    %v991 = vld [vmem:[#allocation7 + $0x230] sm:$0xff]
    %v992 = vld [vmem:[#allocation7 + $0x238] sm:$0xff]
    %v993 = vld [vmem:[#allocation7 + $0x240] sm:$0xff]
    %v994 = vld [vmem:[#allocation7 + $0x248] sm:$0xff]
    %v995 = vld [vmem:[#allocation7 + $0x250] sm:$0xff]
    %v996 = vld [vmem:[#allocation7 + $0x258] sm:$0xff]
    %v997 = vld [vmem:[#allocation7 + $0x260] sm:$0xff]
    %v998 = vld [vmem:[#allocation7 + $0x268] sm:$0xff]
    %v999 = vld [vmem:[#allocation7 + $0x270] sm:$0xff]
    %v1000 = vld [vmem:[#allocation7 + $0x278] sm:$0xff]
    %v1001 = vld [vmem:[#allocation7 + $0x280] sm:$0xff]
    %v1002 = vld [vmem:[#allocation7 + $0x288] sm:$0xff]
    %v1003 = vld [vmem:[#allocation7 + $0x290] sm:$0xff]
    %v1004 = vld [vmem:[#allocation7 + $0x298] sm:$0xff]
    %v1005 = vld [vmem:[#allocation7 + $0x2a0] sm:$0xff]
    %v1006 = vld [vmem:[#allocation7 + $0x2a8] sm:$0xff]
    %v1007 = vld [vmem:[#allocation7 + $0x2b0] sm:$0xff]
    %v1008 = vld [vmem:[#allocation7 + $0x2b8] sm:$0xff]
    %v1009 = vld [vmem:[#allocation7 + $0x2c0] sm:$0xff]
    %v1010 = vld [vmem:[#allocation7 + $0x2c8] sm:$0xff]
    %v1011 = vld [vmem:[#allocation7 + $0x2d0] sm:$0xff]
    %v1012 = vld [vmem:[#allocation7 + $0x2d8] sm:$0xff]
    %v1013 = vld [vmem:[#allocation7 + $0x2e0] sm:$0xff]
    %v1014 = vld [vmem:[#allocation7 + $0x2e8] sm:$0xff]
    %v1015 = vld [vmem:[#allocation7 + $0x2f0] sm:$0xff]
    %v1016 = vld [vmem:[#allocation7 + $0x2f8] sm:$0xff]
    %v1017 = vld [vmem:[#allocation7 + $0x300] sm:$0xff]
    %v1018 = vld [vmem:[#allocation7 + $0x308] sm:$0xff]
    %v1019 = vld [vmem:[#allocation7 + $0x310] sm:$0xff]
    %v1020 = vld [vmem:[#allocation7 + $0x318] sm:$0xff]
    %v1021 = vld [vmem:[#allocation7 + $0x320] sm:$0xff]
    %v1022 = vld [vmem:[#allocation7 + $0x328] sm:$0xff]
    %v1023 = vld [vmem:[#allocation7 + $0x330] sm:$0xff]
    %v1024 = vld [vmem:[#allocation7 + $0x338] sm:$0xff]
    %v1025 = vld [vmem:[#allocation7 + $0x340] sm:$0xff]
    %v1026 = vld [vmem:[#allocation7 + $0x348] sm:$0xff]
    %v1027 = vld [vmem:[#allocation7 + $0x350] sm:$0xff]
    %v1028 = vld [vmem:[#allocation7 + $0x358] sm:$0xff]
    %v1029 = vld [vmem:[#allocation7 + $0x360] sm:$0xff]
    %v1030 = vld [vmem:[#allocation7 + $0x368] sm:$0xff]
    %v1031 = vld [vmem:[#allocation7 + $0x370] sm:$0xff]
    %v1032 = vld [vmem:[#allocation7 + $0x378] sm:$0xff]
    %v1033 = vld [vmem:[#allocation7 + $0x380] sm:$0xff]
    %v1034 = vld [vmem:[#allocation7 + $0x388] sm:$0xff]
    %v1035 = vld [vmem:[#allocation7 + $0x390] sm:$0xff]
    %v1036 = vld [vmem:[#allocation7 + $0x398] sm:$0xff]
    %v1037 = vld [vmem:[#allocation7 + $0x3a0] sm:$0xff]
    %v1038 = vld [vmem:[#allocation7 + $0x3a8] sm:$0xff]
    %v1039 = vld [vmem:[#allocation7 + $0x3b0] sm:$0xff]
    %v1040 = vld [vmem:[#allocation7 + $0x3b8] sm:$0xff]
    %v1041 = vld [vmem:[#allocation7 + $0x3c0] sm:$0xff]
    %v1042 = vld [vmem:[#allocation7 + $0x3c8] sm:$0xff]
    %v1043 = vld [vmem:[#allocation7 + $0x3d0] sm:$0xff]
    %v1044 = vld [vmem:[#allocation7 + $0x3d8] sm:$0xff]
    %v1045 = vld [vmem:[#allocation7 + $0x3e0] sm:$0xff]
    %v1046 = vld [vmem:[#allocation7 + $0x3e8] sm:$0xff]
    %v1047 = vld [vmem:[#allocation7 + $0x3f0] sm:$0xff]
    %v1048 = vld [vmem:[#allocation7 + $0x3f8] sm:$0xff]
    %v1049 = vld [vmem:[%s8] sm:$0xf]
    %v1051 = vlaneseq
    %v1052 = vshrl.u32 %v1051, 7
    %v1053 = vsub.s32 0, %v1052
    %v1054 = vrot.slane %v1049, %v1053
    %v1055 = vlaneseq
    %v1056 = vshrl.u32 %v1055, 7
    %v1057 = vsub.s32 1, %v1056
    %v1058 = vrot.slane %v1049, %v1057
    %v1059 = vlaneseq
    %v1060 = vshrl.u32 %v1059, 7
    %v1061 = vsub.s32 2, %v1060
    %v1062 = vrot.slane %v1049, %v1061
    %v1063 = vlaneseq
    %v1064 = vshrl.u32 %v1063, 7
    %v1065 = vsub.s32 3, %v1064
    %v1066 = vrot.slane %v1049, %v1065
    %v1199 = vunpack.c.l.b16 %v921
    %v1200 = vunpack.c.h.b16 %v921
    %v1201 = vunpack.c.l.b16 %v922
    %v1202 = vunpack.c.h.b16 %v922
    %v1203 = vunpack.c.l.b16 %v923
    %v1204 = vunpack.c.h.b16 %v923
    %v1205 = vunpack.c.l.b16 %v924
    %v1206 = vunpack.c.h.b16 %v924
    %v1207 = vunpack.c.l.b16 %v925
    %v1208 = vunpack.c.h.b16 %v925
    %v1209 = vunpack.c.l.b16 %v926
    %v1210 = vunpack.c.h.b16 %v926
    %v1211 = vunpack.c.l.b16 %v927
    %v1212 = vunpack.c.h.b16 %v927
    %v1213 = vunpack.c.l.b16 %v928
    %v1214 = vunpack.c.h.b16 %v928
    %v1215 = vunpack.c.l.b16 %v929
    %v1216 = vunpack.c.h.b16 %v929
    %v1217 = vunpack.c.l.b16 %v930
    %v1218 = vunpack.c.h.b16 %v930
    %v1219 = vunpack.c.l.b16 %v931
    %v1220 = vunpack.c.h.b16 %v931
    %v1221 = vunpack.c.l.b16 %v932
    %v1222 = vunpack.c.h.b16 %v932
    %v1223 = vunpack.c.l.b16 %v933
    %v1224 = vunpack.c.h.b16 %v933
    %v1225 = vunpack.c.l.b16 %v934
    %v1226 = vunpack.c.h.b16 %v934
    %v1227 = vunpack.c.l.b16 %v935
    %v1228 = vunpack.c.h.b16 %v935
    %v1229 = vunpack.c.l.b16 %v936
    %v1230 = vunpack.c.h.b16 %v936
    %v1231 = vunpack.c.l.b16 %v937
    %v1232 = vunpack.c.h.b16 %v937
    %v1233 = vunpack.c.l.b16 %v938
    %v1234 = vunpack.c.h.b16 %v938
    %v1235 = vunpack.c.l.b16 %v939
    %v1236 = vunpack.c.h.b16 %v939
    %v1237 = vunpack.c.l.b16 %v940
    %v1238 = vunpack.c.h.b16 %v940
    %v1239 = vunpack.c.l.b16 %v941
    %v1240 = vunpack.c.h.b16 %v941
    %v1241 = vunpack.c.l.b16 %v942
    %v1242 = vunpack.c.h.b16 %v942
    %v1243 = vunpack.c.l.b16 %v943
    %v1244 = vunpack.c.h.b16 %v943
    %v1245 = vunpack.c.l.b16 %v944
    %v1246 = vunpack.c.h.b16 %v944
    %v1247 = vunpack.c.l.b16 %v945
    %v1248 = vunpack.c.h.b16 %v945
    %v1249 = vunpack.c.l.b16 %v946
    %v1250 = vunpack.c.h.b16 %v946
    %v1251 = vunpack.c.l.b16 %v947
    %v1252 = vunpack.c.h.b16 %v947
    %v1253 = vunpack.c.l.b16 %v948
    %v1254 = vunpack.c.h.b16 %v948
    %v1255 = vunpack.c.l.b16 %v949
    %v1256 = vunpack.c.h.b16 %v949
    %v1257 = vunpack.c.l.b16 %v950
    %v1258 = vunpack.c.h.b16 %v950
    %v1259 = vunpack.c.l.b16 %v951
    %v1260 = vunpack.c.h.b16 %v951
    %v1261 = vunpack.c.l.b16 %v952
    %v1262 = vunpack.c.h.b16 %v952
    %v1263 = vunpack.c.l.b16 %v953
    %v1264 = vunpack.c.h.b16 %v953
    %v1265 = vunpack.c.l.b16 %v954
    %v1266 = vunpack.c.h.b16 %v954
    %v1267 = vunpack.c.l.b16 %v955
    %v1268 = vunpack.c.h.b16 %v955
    %v1269 = vunpack.c.l.b16 %v956
    %v1270 = vunpack.c.h.b16 %v956
    %v1271 = vunpack.c.l.b16 %v957
    %v1272 = vunpack.c.h.b16 %v957
    %v1273 = vunpack.c.l.b16 %v958
    %v1274 = vunpack.c.h.b16 %v958
    %v1275 = vunpack.c.l.b16 %v959
    %v1276 = vunpack.c.h.b16 %v959
    %v1277 = vunpack.c.l.b16 %v960
    %v1278 = vunpack.c.h.b16 %v960
    %v1279 = vunpack.c.l.b16 %v961
    %v1280 = vunpack.c.h.b16 %v961
    %v1281 = vunpack.c.l.b16 %v962
    %v1282 = vunpack.c.h.b16 %v962
    %v1283 = vunpack.c.l.b16 %v963
    %v1284 = vunpack.c.h.b16 %v963
    %v1285 = vunpack.c.l.b16 %v964
    %v1286 = vunpack.c.h.b16 %v964
    %v1287 = vunpack.c.l.b16 %v965
    %v1288 = vunpack.c.h.b16 %v965
    %v1289 = vunpack.c.l.b16 %v966
    %v1290 = vunpack.c.h.b16 %v966
    %v1291 = vunpack.c.l.b16 %v967
    %v1292 = vunpack.c.h.b16 %v967
    %v1293 = vunpack.c.l.b16 %v968
    %v1294 = vunpack.c.h.b16 %v968
    %v1295 = vunpack.c.l.b16 %v969
    %v1296 = vunpack.c.h.b16 %v969
    %v1297 = vunpack.c.l.b16 %v970
    %v1298 = vunpack.c.h.b16 %v970
    %v1299 = vunpack.c.l.b16 %v971
    %v1300 = vunpack.c.h.b16 %v971
    %v1301 = vunpack.c.l.b16 %v972
    %v1302 = vunpack.c.h.b16 %v972
    %v1303 = vunpack.c.l.b16 %v973
    %v1304 = vunpack.c.h.b16 %v973
    %v1305 = vunpack.c.l.b16 %v974
    %v1306 = vunpack.c.h.b16 %v974
    %v1307 = vunpack.c.l.b16 %v975
    %v1308 = vunpack.c.h.b16 %v975
    %v1309 = vunpack.c.l.b16 %v976
    %v1310 = vunpack.c.h.b16 %v976
    %v1311 = vunpack.c.l.b16 %v977
    %v1312 = vunpack.c.h.b16 %v977
    %v1313 = vunpack.c.l.b16 %v978
    %v1314 = vunpack.c.h.b16 %v978
    %v1315 = vunpack.c.l.b16 %v979
    %v1316 = vunpack.c.h.b16 %v979
    %v1317 = vunpack.c.l.b16 %v980
    %v1318 = vunpack.c.h.b16 %v980
    %v1319 = vunpack.c.l.b16 %v981
    %v1320 = vunpack.c.h.b16 %v981
    %v1321 = vunpack.c.l.b16 %v982
    %v1322 = vunpack.c.h.b16 %v982
    %v1323 = vunpack.c.l.b16 %v983
    %v1324 = vunpack.c.h.b16 %v983
    %v1325 = vunpack.c.l.b16 %v984
    %v1326 = vunpack.c.h.b16 %v984
    %v1327 = vunpack.c.l.b16 %v985
    %v1328 = vunpack.c.h.b16 %v985
    %v1329 = vunpack.c.l.b16 %v986
    %v1330 = vunpack.c.h.b16 %v986
    %v1331 = vunpack.c.l.b16 %v987
    %v1332 = vunpack.c.h.b16 %v987
    %v1333 = vunpack.c.l.b16 %v988
    %v1334 = vunpack.c.h.b16 %v988
    %v1335 = vunpack.c.l.b16 %v989
    %v1336 = vunpack.c.h.b16 %v989
    %v1337 = vunpack.c.l.b16 %v990
    %v1338 = vunpack.c.h.b16 %v990
    %v1339 = vunpack.c.l.b16 %v991
    %v1340 = vunpack.c.h.b16 %v991
    %v1341 = vunpack.c.l.b16 %v992
    %v1342 = vunpack.c.h.b16 %v992
    %v1343 = vunpack.c.l.b16 %v993
    %v1344 = vunpack.c.h.b16 %v993
    %v1345 = vunpack.c.l.b16 %v994
    %v1346 = vunpack.c.h.b16 %v994
    %v1347 = vunpack.c.l.b16 %v995
    %v1348 = vunpack.c.h.b16 %v995
    %v1349 = vunpack.c.l.b16 %v996
    %v1350 = vunpack.c.h.b16 %v996
    %v1351 = vunpack.c.l.b16 %v997
    %v1352 = vunpack.c.h.b16 %v997
    %v1353 = vunpack.c.l.b16 %v998
    %v1354 = vunpack.c.h.b16 %v998
    %v1355 = vunpack.c.l.b16 %v999
    %v1356 = vunpack.c.h.b16 %v999
    %v1357 = vunpack.c.l.b16 %v1000
    %v1358 = vunpack.c.h.b16 %v1000
    %v1359 = vunpack.c.l.b16 %v1001
    %v1360 = vunpack.c.h.b16 %v1001
    %v1361 = vunpack.c.l.b16 %v1002
    %v1362 = vunpack.c.h.b16 %v1002
    %v1363 = vunpack.c.l.b16 %v1003
    %v1364 = vunpack.c.h.b16 %v1003
    %v1365 = vunpack.c.l.b16 %v1004
    %v1366 = vunpack.c.h.b16 %v1004
    %v1367 = vunpack.c.l.b16 %v1005
    %v1368 = vunpack.c.h.b16 %v1005
    %v1369 = vunpack.c.l.b16 %v1006
    %v1370 = vunpack.c.h.b16 %v1006
    %v1371 = vunpack.c.l.b16 %v1007
    %v1372 = vunpack.c.h.b16 %v1007
    %v1373 = vunpack.c.l.b16 %v1008
    %v1374 = vunpack.c.h.b16 %v1008
    %v1375 = vunpack.c.l.b16 %v1009
    %v1376 = vunpack.c.h.b16 %v1009
    %v1377 = vunpack.c.l.b16 %v1010
    %v1378 = vunpack.c.h.b16 %v1010
    %v1379 = vunpack.c.l.b16 %v1011
    %v1380 = vunpack.c.h.b16 %v1011
    %v1381 = vunpack.c.l.b16 %v1012
    %v1382 = vunpack.c.h.b16 %v1012
    %v1383 = vunpack.c.l.b16 %v1013
    %v1384 = vunpack.c.h.b16 %v1013
    %v1385 = vunpack.c.l.b16 %v1014
    %v1386 = vunpack.c.h.b16 %v1014
    %v1387 = vunpack.c.l.b16 %v1015
    %v1388 = vunpack.c.h.b16 %v1015
    %v1389 = vunpack.c.l.b16 %v1016
    %v1390 = vunpack.c.h.b16 %v1016
    %v1391 = vunpack.c.l.b16 %v1017
    %v1392 = vunpack.c.h.b16 %v1017
    %v1393 = vunpack.c.l.b16 %v1018
    %v1394 = vunpack.c.h.b16 %v1018
    %v1395 = vunpack.c.l.b16 %v1019
    %v1396 = vunpack.c.h.b16 %v1019
    %v1397 = vunpack.c.l.b16 %v1020
    %v1398 = vunpack.c.h.b16 %v1020
    %v1399 = vunpack.c.l.b16 %v1021
    %v1400 = vunpack.c.h.b16 %v1021
    %v1401 = vunpack.c.l.b16 %v1022
    %v1402 = vunpack.c.h.b16 %v1022
    %v1403 = vunpack.c.l.b16 %v1023
    %v1404 = vunpack.c.h.b16 %v1023
    %v1405 = vunpack.c.l.b16 %v1024
    %v1406 = vunpack.c.h.b16 %v1024
    %v1407 = vunpack.c.l.b16 %v1025
    %v1408 = vunpack.c.h.b16 %v1025
    %v1409 = vunpack.c.l.b16 %v1026
    %v1410 = vunpack.c.h.b16 %v1026
    %v1411 = vunpack.c.l.b16 %v1027
    %v1412 = vunpack.c.h.b16 %v1027
    %v1413 = vunpack.c.l.b16 %v1028
    %v1414 = vunpack.c.h.b16 %v1028
    %v1415 = vunpack.c.l.b16 %v1029
    %v1416 = vunpack.c.h.b16 %v1029
    %v1417 = vunpack.c.l.b16 %v1030
    %v1418 = vunpack.c.h.b16 %v1030
    %v1419 = vunpack.c.l.b16 %v1031
    %v1420 = vunpack.c.h.b16 %v1031
    %v1421 = vunpack.c.l.b16 %v1032
    %v1422 = vunpack.c.h.b16 %v1032
    %v1423 = vunpack.c.l.b16 %v1033
    %v1424 = vunpack.c.h.b16 %v1033
    %v1425 = vunpack.c.l.b16 %v1034
    %v1426 = vunpack.c.h.b16 %v1034
    %v1427 = vunpack.c.l.b16 %v1035
    %v1428 = vunpack.c.h.b16 %v1035
    %v1429 = vunpack.c.l.b16 %v1036
    %v1430 = vunpack.c.h.b16 %v1036
    %v1431 = vunpack.c.l.b16 %v1037
    %v1432 = vunpack.c.h.b16 %v1037
    %v1433 = vunpack.c.l.b16 %v1038
    %v1434 = vunpack.c.h.b16 %v1038
    %v1435 = vunpack.c.l.b16 %v1039
    %v1436 = vunpack.c.h.b16 %v1039
    %v1437 = vunpack.c.l.b16 %v1040
    %v1438 = vunpack.c.h.b16 %v1040
    %v1439 = vunpack.c.l.b16 %v1041
    %v1440 = vunpack.c.h.b16 %v1041
    %v1441 = vunpack.c.l.b16 %v1042
    %v1442 = vunpack.c.h.b16 %v1042
    %v1443 = vunpack.c.l.b16 %v1043
    %v1444 = vunpack.c.h.b16 %v1043
    %v1445 = vunpack.c.l.b16 %v1044
    %v1446 = vunpack.c.h.b16 %v1044
    %v1447 = vunpack.c.l.b16 %v1045
    %v1448 = vunpack.c.h.b16 %v1045
    %v1449 = vunpack.c.l.b16 %v1046
    %v1450 = vunpack.c.h.b16 %v1046
    %v1451 = vunpack.c.l.b16 %v1047
    %v1452 = vunpack.c.h.b16 %v1047
    %v1453 = vunpack.c.l.b16 %v1048
    %v1454 = vunpack.c.h.b16 %v1048
    %v1455 = vpack.c.b16 %v1203, %v1199
    %v1456 = vpack.c.b16 %v1204, %v1200
    %v1457 = vpack.c.b16 %v1205, %v1201
    %v1458 = vpack.c.b16 %v1206, %v1202
    %v1459 = vpack.c.b16 %v1211, %v1207
    %v1460 = vpack.c.b16 %v1212, %v1208
    %v1461 = vpack.c.b16 %v1213, %v1209
    %v1462 = vpack.c.b16 %v1214, %v1210
    %v1463 = vpack.c.b16 %v1219, %v1215
    %v1464 = vpack.c.b16 %v1220, %v1216
    %v1465 = vpack.c.b16 %v1221, %v1217
    %v1466 = vpack.c.b16 %v1222, %v1218
    %v1467 = vpack.c.b16 %v1227, %v1223
    %v1468 = vpack.c.b16 %v1228, %v1224
    %v1469 = vpack.c.b16 %v1229, %v1225
    %v1470 = vpack.c.b16 %v1230, %v1226
    %v1471 = vpack.c.b16 %v1235, %v1231
    %v1472 = vpack.c.b16 %v1236, %v1232
    %v1473 = vpack.c.b16 %v1237, %v1233
    %v1474 = vpack.c.b16 %v1238, %v1234
    %v1475 = vpack.c.b16 %v1243, %v1239
    %v1476 = vpack.c.b16 %v1244, %v1240
    %v1477 = vpack.c.b16 %v1245, %v1241
    %v1478 = vpack.c.b16 %v1246, %v1242
    %v1479 = vpack.c.b16 %v1251, %v1247
    %v1480 = vpack.c.b16 %v1252, %v1248
    %v1481 = vpack.c.b16 %v1253, %v1249
    %v1482 = vpack.c.b16 %v1254, %v1250
    %v1483 = vpack.c.b16 %v1259, %v1255
    %v1484 = vpack.c.b16 %v1260, %v1256
    %v1485 = vpack.c.b16 %v1261, %v1257
    %v1486 = vpack.c.b16 %v1262, %v1258
    %v1487 = vpack.c.b16 %v1267, %v1263
    %v1488 = vpack.c.b16 %v1268, %v1264
    %v1489 = vpack.c.b16 %v1269, %v1265
    %v1490 = vpack.c.b16 %v1270, %v1266
    %v1491 = vpack.c.b16 %v1275, %v1271
    %v1492 = vpack.c.b16 %v1276, %v1272
    %v1493 = vpack.c.b16 %v1277, %v1273
    %v1494 = vpack.c.b16 %v1278, %v1274
    %v1495 = vpack.c.b16 %v1283, %v1279
    %v1496 = vpack.c.b16 %v1284, %v1280
    %v1497 = vpack.c.b16 %v1285, %v1281
    %v1498 = vpack.c.b16 %v1286, %v1282
    %v1499 = vpack.c.b16 %v1291, %v1287
    %v1500 = vpack.c.b16 %v1292, %v1288
    %v1501 = vpack.c.b16 %v1293, %v1289
    %v1502 = vpack.c.b16 %v1294, %v1290
    %v1503 = vpack.c.b16 %v1299, %v1295
    %v1504 = vpack.c.b16 %v1300, %v1296
    %v1505 = vpack.c.b16 %v1301, %v1297
    %v1506 = vpack.c.b16 %v1302, %v1298
    %v1507 = vpack.c.b16 %v1307, %v1303
    %v1508 = vpack.c.b16 %v1308, %v1304
    %v1509 = vpack.c.b16 %v1309, %v1305
    %v1510 = vpack.c.b16 %v1310, %v1306
    %v1511 = vpack.c.b16 %v1315, %v1311
    %v1512 = vpack.c.b16 %v1316, %v1312
    %v1513 = vpack.c.b16 %v1317, %v1313
    %v1514 = vpack.c.b16 %v1318, %v1314
    %v1515 = vpack.c.b16 %v1323, %v1319
    %v1516 = vpack.c.b16 %v1324, %v1320
    %v1517 = vpack.c.b16 %v1325, %v1321
    %v1518 = vpack.c.b16 %v1326, %v1322
    %v1519 = vpack.c.b16 %v1331, %v1327
    %v1520 = vpack.c.b16 %v1332, %v1328
    %v1521 = vpack.c.b16 %v1333, %v1329
    %v1522 = vpack.c.b16 %v1334, %v1330
    %v1523 = vpack.c.b16 %v1339, %v1335
    %v1524 = vpack.c.b16 %v1340, %v1336
    %v1525 = vpack.c.b16 %v1341, %v1337
    %v1526 = vpack.c.b16 %v1342, %v1338
    %v1527 = vpack.c.b16 %v1347, %v1343
    %v1528 = vpack.c.b16 %v1348, %v1344
    %v1529 = vpack.c.b16 %v1349, %v1345
    %v1530 = vpack.c.b16 %v1350, %v1346
    %v1531 = vpack.c.b16 %v1355, %v1351
    %v1532 = vpack.c.b16 %v1356, %v1352
    %v1533 = vpack.c.b16 %v1357, %v1353
    %v1534 = vpack.c.b16 %v1358, %v1354
    %v1535 = vpack.c.b16 %v1363, %v1359
    %v1536 = vpack.c.b16 %v1364, %v1360
    %v1537 = vpack.c.b16 %v1365, %v1361
    %v1538 = vpack.c.b16 %v1366, %v1362
    %v1539 = vpack.c.b16 %v1371, %v1367
    %v1540 = vpack.c.b16 %v1372, %v1368
    %v1541 = vpack.c.b16 %v1373, %v1369
    %v1542 = vpack.c.b16 %v1374, %v1370
    %v1543 = vpack.c.b16 %v1379, %v1375
    %v1544 = vpack.c.b16 %v1380, %v1376
    %v1545 = vpack.c.b16 %v1381, %v1377
    %v1546 = vpack.c.b16 %v1382, %v1378
    %v1547 = vpack.c.b16 %v1387, %v1383
    %v1548 = vpack.c.b16 %v1388, %v1384
    %v1549 = vpack.c.b16 %v1389, %v1385
    %v1550 = vpack.c.b16 %v1390, %v1386
    %v1551 = vpack.c.b16 %v1395, %v1391
    %v1552 = vpack.c.b16 %v1396, %v1392
    %v1553 = vpack.c.b16 %v1397, %v1393
    %v1554 = vpack.c.b16 %v1398, %v1394
    %v1555 = vpack.c.b16 %v1403, %v1399
    %v1556 = vpack.c.b16 %v1404, %v1400
    %v1557 = vpack.c.b16 %v1405, %v1401
    %v1558 = vpack.c.b16 %v1406, %v1402
    %v1559 = vpack.c.b16 %v1411, %v1407
    %v1560 = vpack.c.b16 %v1412, %v1408
    %v1561 = vpack.c.b16 %v1413, %v1409
    %v1562 = vpack.c.b16 %v1414, %v1410
    %v1563 = vpack.c.b16 %v1419, %v1415
    %v1564 = vpack.c.b16 %v1420, %v1416
    %v1565 = vpack.c.b16 %v1421, %v1417
    %v1566 = vpack.c.b16 %v1422, %v1418
    %v1567 = vpack.c.b16 %v1427, %v1423
    %v1568 = vpack.c.b16 %v1428, %v1424
    %v1569 = vpack.c.b16 %v1429, %v1425
    %v1570 = vpack.c.b16 %v1430, %v1426
    %v1571 = vpack.c.b16 %v1435, %v1431
    %v1572 = vpack.c.b16 %v1436, %v1432
    %v1573 = vpack.c.b16 %v1437, %v1433
    %v1574 = vpack.c.b16 %v1438, %v1434
    %v1575 = vpack.c.b16 %v1443, %v1439
    %v1576 = vpack.c.b16 %v1444, %v1440
    %v1577 = vpack.c.b16 %v1445, %v1441
    %v1578 = vpack.c.b16 %v1446, %v1442
    %v1579 = vpack.c.b16 %v1451, %v1447
    %v1580 = vpack.c.b16 %v1452, %v1448
    %v1581 = vpack.c.b16 %v1453, %v1449
    %v1582 = vpack.c.b16 %v1454, %v1450
    %1711 = vmatprep.subr.bf16.mxu0 %v1456
    %1712 = vmatpush1.bf16.msra.mxu0 %v1455
    %1713 = vmatprep.subr.bf16.mxu0 %v1460
    %1714 = vmatpush1.bf16.msra.mxu0 %v1459
    %1715 = vmatprep.subr.bf16.mxu0 %v1464
    %1716 = vmatpush1.bf16.msra.mxu0 %v1463
    %1717 = vmatprep.subr.bf16.mxu0 %v1468
    %1718 = vmatpush1.bf16.msra.mxu0 %v1467
    %1719 = vmatprep.subr.bf16.mxu0 %v1472
    %1720 = vmatpush1.bf16.msra.mxu0 %v1471
    %1721 = vmatprep.subr.bf16.mxu0 %v1476
    %1722 = vmatpush1.bf16.msra.mxu0 %v1475
    %1723 = vmatprep.subr.bf16.mxu0 %v1480
    %1724 = vmatpush1.bf16.msra.mxu0 %v1479
    %1725 = vmatprep.subr.bf16.mxu0 %v1484
    %1726 = vmatpush1.bf16.msra.mxu0 %v1483
    %1727 = vmatprep.subr.bf16.mxu0 %v1488
    %1728 = vmatpush1.bf16.msra.mxu0 %v1487
    %1729 = vmatprep.subr.bf16.mxu0 %v1492
    %1730 = vmatpush1.bf16.msra.mxu0 %v1491
    %1731 = vmatprep.subr.bf16.mxu0 %v1496
    %1732 = vmatpush1.bf16.msra.mxu0 %v1495
    %1733 = vmatprep.subr.bf16.mxu0 %v1500
    %1734 = vmatpush1.bf16.msra.mxu0 %v1499
    %1735 = vmatprep.subr.bf16.mxu0 %v1504
    %1736 = vmatpush1.bf16.msra.mxu0 %v1503
    %1737 = vmatprep.subr.bf16.mxu0 %v1508
    %1738 = vmatpush1.bf16.msra.mxu0 %v1507
    %1739 = vmatprep.subr.bf16.mxu0 %v1512
    %1740 = vmatpush1.bf16.msra.mxu0 %v1511
    %1741 = vmatprep.subr.bf16.mxu0 %v1516
    %1742 = vmatpush1.bf16.msra.mxu0 %v1515
    %1743 = vmatprep.mubr.bf16.mxu0 %v918
    %1744 = vmatmul.mubr.bf16.gmra.mrb[0].mxu0 %v917
    %v1745 = vpop.f32.mrb[0].mxu0
    %v1746 = vadd.f32 %v1054, %v1745
    %v1747 = vpop.f32.mrb[0].mxu0
    %v1748 = vadd.f32 %v1058, %v1747
    %v1749 = vpop.f32.mrb[0].mxu0
    %v1750 = vadd.f32 %v1054, %v1749
    %v1751 = vpop.f32.mrb[0].mxu0
    %v1752 = vadd.f32 %v1058, %v1751
    %1753 = vdwg.mxu0
    %1754 = vmatprep.subr.bf16.mxu0 %v1520
    %1755 = vmatpush1.bf16.msra.mxu0 %v1519
    %1756 = vmatprep.subr.bf16.mxu0 %v1524
    %1757 = vmatpush1.bf16.msra.mxu0 %v1523
    %1758 = vmatprep.subr.bf16.mxu0 %v1528
    %1759 = vmatpush1.bf16.msra.mxu0 %v1527
    %1760 = vmatprep.subr.bf16.mxu0 %v1532
    %1761 = vmatpush1.bf16.msra.mxu0 %v1531
    %1762 = vmatprep.subr.bf16.mxu0 %v1536
    %1763 = vmatpush1.bf16.msra.mxu0 %v1535
    %1764 = vmatprep.subr.bf16.mxu0 %v1540
    %1765 = vmatpush1.bf16.msra.mxu0 %v1539
    %1766 = vmatprep.subr.bf16.mxu0 %v1544
    %1767 = vmatpush1.bf16.msra.mxu0 %v1543
    %1768 = vmatprep.subr.bf16.mxu0 %v1548
    %1769 = vmatpush1.bf16.msra.mxu0 %v1547
    %1770 = vmatprep.subr.bf16.mxu0 %v1552
    %1771 = vmatpush1.bf16.msra.mxu0 %v1551
    %1772 = vmatprep.subr.bf16.mxu0 %v1556
    %1773 = vmatpush1.bf16.msra.mxu0 %v1555
    %1774 = vmatprep.subr.bf16.mxu0 %v1560
    %1775 = vmatpush1.bf16.msra.mxu0 %v1559
    %1776 = vmatprep.subr.bf16.mxu0 %v1564
    %1777 = vmatpush1.bf16.msra.mxu0 %v1563
    %1778 = vmatprep.subr.bf16.mxu0 %v1568
    %1779 = vmatpush1.bf16.msra.mxu0 %v1567
    %1780 = vmatprep.subr.bf16.mxu0 %v1572
    %1781 = vmatpush1.bf16.msra.mxu0 %v1571
    %1782 = vmatprep.subr.bf16.mxu0 %v1576
    %1783 = vmatpush1.bf16.msra.mxu0 %v1575
    %1784 = vmatprep.subr.bf16.mxu0 %v1580
    %1785 = vmatpush1.bf16.msra.mxu0 %v1579
    %1786 = vmatprep.mubr.bf16.mxu0 %v920
    %1787 = vmatmul.mubr.bf16.gmra.mrb[0].mxu0 %v919
    %v1788 = vpop.f32.mrb[0].mxu0
    %v1789 = vadd.f32 %v1746, %v1788
    %v1790 = vpop.f32.mrb[0].mxu0
    %v1791 = vadd.f32 %v1748, %v1790
    %v1792 = vpop.f32.mrb[0].mxu0
    %v1793 = vadd.f32 %v1750, %v1792
    %v1794 = vpop.f32.mrb[0].mxu0
    %v1795 = vadd.f32 %v1752, %v1794
    %1796 = vdwg.mxu0
    %1797 = vmatprep.subr.bf16.mxu0 %v1458
    %1798 = vmatpush1.bf16.msra.mxu0 %v1457
    %1799 = vmatprep.subr.bf16.mxu0 %v1462
    %1800 = vmatpush1.bf16.msra.mxu0 %v1461
    %1801 = vmatprep.subr.bf16.mxu0 %v1466
    %1802 = vmatpush1.bf16.msra.mxu0 %v1465
    %1803 = vmatprep.subr.bf16.mxu0 %v1470
    %1804 = vmatpush1.bf16.msra.mxu0 %v1469
    %1805 = vmatprep.subr.bf16.mxu0 %v1474
    %1806 = vmatpush1.bf16.msra.mxu0 %v1473
    %1807 = vmatprep.subr.bf16.mxu0 %v1478
    %1808 = vmatpush1.bf16.msra.mxu0 %v1477
    %1809 = vmatprep.subr.bf16.mxu0 %v1482
    %1810 = vmatpush1.bf16.msra.mxu0 %v1481
    %1811 = vmatprep.subr.bf16.mxu0 %v1486
    %1812 = vmatpush1.bf16.msra.mxu0 %v1485
    %1813 = vmatprep.subr.bf16.mxu0 %v1490
    %1814 = vmatpush1.bf16.msra.mxu0 %v1489
    %1815 = vmatprep.subr.bf16.mxu0 %v1494
    %1816 = vmatpush1.bf16.msra.mxu0 %v1493
    %1817 = vmatprep.subr.bf16.mxu0 %v1498
    %1818 = vmatpush1.bf16.msra.mxu0 %v1497
    %1819 = vmatprep.subr.bf16.mxu0 %v1502
    %1820 = vmatpush1.bf16.msra.mxu0 %v1501
    %1821 = vmatprep.subr.bf16.mxu0 %v1506
    %1822 = vmatpush1.bf16.msra.mxu0 %v1505
    %1823 = vmatprep.subr.bf16.mxu0 %v1510
    %1824 = vmatpush1.bf16.msra.mxu0 %v1509
    %1825 = vmatprep.subr.bf16.mxu0 %v1514
    %1826 = vmatpush1.bf16.msra.mxu0 %v1513
    %1827 = vmatprep.subr.bf16.mxu0 %v1518
    %1828 = vmatpush1.bf16.msra.mxu0 %v1517
    %1829 = vmatprep.mubr.bf16.mxu0 %v918
    %1830 = vmatmul.mubr.bf16.gmra.mrb[0].mxu0 %v917
    %v1831 = vpop.f32.mrb[0].mxu0
    %v1832 = vadd.f32 %v1062, %v1831
    %v1833 = vpop.f32.mrb[0].mxu0
    %v1834 = vadd.f32 %v1066, %v1833
    %v1835 = vpop.f32.mrb[0].mxu0
    %v1836 = vadd.f32 %v1062, %v1835
    %v1837 = vpop.f32.mrb[0].mxu0
    %v1838 = vadd.f32 %v1066, %v1837
    %1839 = vdwg.mxu0
    %1840 = vmatprep.subr.bf16.mxu0 %v1522
    %1841 = vmatpush1.bf16.msra.mxu0 %v1521
    %1842 = vmatprep.subr.bf16.mxu0 %v1526
    %1843 = vmatpush1.bf16.msra.mxu0 %v1525
    %1844 = vmatprep.subr.bf16.mxu0 %v1530
    %1845 = vmatpush1.bf16.msra.mxu0 %v1529
    %1846 = vmatprep.subr.bf16.mxu0 %v1534
    %1847 = vmatpush1.bf16.msra.mxu0 %v1533
    %1848 = vmatprep.subr.bf16.mxu0 %v1538
    %1849 = vmatpush1.bf16.msra.mxu0 %v1537
    %1850 = vmatprep.subr.bf16.mxu0 %v1542
    %1851 = vmatpush1.bf16.msra.mxu0 %v1541
    %1852 = vmatprep.subr.bf16.mxu0 %v1546
    %1853 = vmatpush1.bf16.msra.mxu0 %v1545
    %1854 = vmatprep.subr.bf16.mxu0 %v1550
    %1855 = vmatpush1.bf16.msra.mxu0 %v1549
    %1856 = vmatprep.subr.bf16.mxu0 %v1554
    %1857 = vmatpush1.bf16.msra.mxu0 %v1553
    %1858 = vmatprep.subr.bf16.mxu0 %v1558
    %1859 = vmatpush1.bf16.msra.mxu0 %v1557
    %1860 = vmatprep.subr.bf16.mxu0 %v1562
    %1861 = vmatpush1.bf16.msra.mxu0 %v1561
    %1862 = vmatprep.subr.bf16.mxu0 %v1566
    %1863 = vmatpush1.bf16.msra.mxu0 %v1565
    %1864 = vmatprep.subr.bf16.mxu0 %v1570
    %1865 = vmatpush1.bf16.msra.mxu0 %v1569
    %1866 = vmatprep.subr.bf16.mxu0 %v1574
    %1867 = vmatpush1.bf16.msra.mxu0 %v1573
    %1868 = vmatprep.subr.bf16.mxu0 %v1578
    %1869 = vmatpush1.bf16.msra.mxu0 %v1577
    %1870 = vmatprep.subr.bf16.mxu0 %v1582
    %1871 = vmatpush1.bf16.msra.mxu0 %v1581
    %1872 = vmatprep.mubr.bf16.mxu0 %v920
    %1873 = vmatmul.mubr.bf16.gmra.mrb[0].mxu0 %v919
    %v1874 = vpop.f32.mrb[0].mxu0
    %v1875 = vadd.f32 %v1832, %v1874
    %v1876 = vpop.f32.mrb[0].mxu0
    %v1877 = vadd.f32 %v1834, %v1876
    %v1878 = vpop.f32.mrb[0].mxu0
    %v1879 = vadd.f32 %v1836, %v1878
    %v1880 = vpop.f32.mrb[0].mxu0
    %v1881 = vadd.f32 %v1838, %v1880
    %1882 = vdwg.mxu0
    %1883 = vst [vmem:[#allocation8] sm:$0xff] %v1789
    %1884 = vst [vmem:[#allocation8 + $0x8] sm:$0xff] %v1791
    %1885 = vst [vmem:[#allocation8 + $0x10] sm:$0xff] %v1875
    %1886 = vst [vmem:[#allocation8 + $0x18] sm:$0xff] %v1877
    %1887 = vst [vmem:[#allocation8 + $0x20] sm:$0xff] %v1793
    %1888 = vst [vmem:[#allocation8 + $0x28] sm:$0xff] %v1795
    %1889 = vst [vmem:[#allocation8 + $0x30] sm:$0xff] %v1879
    %1890 = vst [vmem:[#allocation8 + $0x38] sm:$0xff] %v1881
    // Predicated region
    $region50: #{tpu_custom_call.1} parent=1 // pred_check
      _
    $region51: #{tpu_custom_call.1} parent=1 // pred_check_branch
      %1892 = sbr.rel (0) target = $region53
    $region52: #{tpu_custom_call.1} parent=1 // pred_region
      %s1894 = ssub.s32 1024, 1024
      %1895 = vsyncadd [#allocation4], %s1894
      %s1896 = sshll.u32 [#allocation8], 4
      %s1897 = int_to_ptr.vmem [resolvable:$true] %s1896
      %1902 = dma.vmem_to_hbm [thread:$0]  %s1897, 1024, %s9, [#allocation4], 512, 512, 32
    $region53: #{tpu_custom_call.1} parent=1 // pred_fallthru
      _
    // Predicated region
    $region54: #{tpu_custom_call.1} parent=1 // pred_check
      _
    $region55: #{tpu_custom_call.1} parent=1 // pred_check_branch
      %1904 = sbr.rel (0) target = $region57
    $region56: #{tpu_custom_call.1} parent=1 // pred_region
      %1905 = dma.done [#allocation4], 1024
    $region57: #{tpu_custom_call.1} parent=1 // pred_fallthru
      _
    %1906 = vsyncpa [#allocation3], 1
    %1907 = vsyncpa [#allocation6], 1
    %1908 = vsyncpa [#allocation4], 1

</llo_original>
